<compile_context>
chip_gen: v6e
topology: v6e:2x2x1
jax: 0.10.0
libtpu: 0.0.40
codegen_flags: <defaults>
</compile_context>

<pallas_src>
import functools

import jax
import jax.numpy as jnp
from jax.experimental import pallas as pl
from jax.experimental.pallas import tpu as pltpu

# ---- model hyperparameters (PyTorch module defaults) ------------------------
INPUT_DIM = 19                       # raw input width
FEAT_DIM = INPUT_DIM - 1             # 18  (self.input_dim)
PAIR_EMB_DIM = 5
PAIR_HID = 20
REPR_DIM = 100
N_EXPERTS = 5
N_PAIRS = 12
HID = FEAT_DIM + N_PAIRS * PAIR_EMB_DIM      # 78
EXPERT_IN = HID + 20                         # 98
NEG_SLOPE = 0.01                             # LeakyReLU default
BN_EPS = 1e-5

# ---- fused / padded layout constants ----------------------------------------
KPAD = 128                    # contraction dim for the x matmul, padded 19 -> 128
S1 = 256                      # stage-A width: 240 pair-hidden + 10 beta-hidden + pad
HPAD = 128                    # per-expert hidden width padded 78 -> 128
H1W = N_EXPERTS * HPAD        # 640: all experts' layer-1 outputs, lane aligned
WXW = S1 + H1W                # 896: combined x-matmul output width


def _round_up(n, m):
    return ((n + m - 1) // m) * m


def _pair_cols(i):
    # mirrors the two torch.stack loops in forward()
    if i < 6:
        return i, 6 + i
    return i - 6, 12 + (i - 6)


def _leaky(x):
    return jnp.where(x > 0, x, NEG_SLOPE * x)


# =============================================================================
# Kernels
# =============================================================================
def _h1_stats_kernel(x_ref, wx_ref, bx_ref, m1_ref, h1_ref, stats_ref, *, b_real):
    """Pass 1: compute pre-BN layer-1 activations H1 (spilled lane-dense to HBM)
    plus masked per-tile sum / sum-of-squares for exact full-batch BatchNorm."""
    tb = x_ref.shape[0]
    xb = x_ref[...].astype(jnp.bfloat16)                                 # (TB, 128)
    t = jnp.dot(xb, wx_ref[...],
                preferred_element_type=jnp.float32) + bx_ref[...]        # (TB, 896) f32
    a = _leaky(t[:, :S1]).astype(jnp.bfloat16)                           # pair/beta hidden
    h1 = t[:, S1:] + jnp.dot(a, m1_ref[...],
                             preferred_element_type=jnp.float32)         # (TB, 640) f32
    h1_ref[...] = h1                                                     # spill for pass 2

    row = jax.lax.broadcasted_iota(jnp.int32, (tb, 1), 0) + pl.program_id(0) * tb
    h1m = jnp.where(row < b_real, h1, 0.0)                # drop padded batch rows
    stats_ref[...] = jnp.zeros_like(stats_ref)            # zero-fill unused sublanes
    stats_ref[0, 0:1, :] = jnp.sum(h1m, axis=0, keepdims=True)
    stats_ref[0, 1:2, :] = jnp.sum(h1m * h1m, axis=0, keepdims=True)


def _expert_kernel(h1_ref, scale_ref, shift_ref, w2_ref, b2_ref, out_ref):
    """Pass 2: fused BN (scale/shift) + LeakyReLU, then expert layer-2 matmuls."""
    h = _leaky(h1_ref[...] * scale_ref[...] + shift_ref[...]).astype(jnp.bfloat16)
    for e in range(N_EXPERTS):                            # 5 lane-aligned 128x128 matmuls
        he = h[:, e * HPAD:(e + 1) * HPAD]
        oe = jnp.dot(he, w2_ref[e], preferred_element_type=jnp.float32)
        out_ref[:, e * HPAD:(e + 1) * HPAD] = oe + b2_ref[e:e + 1, :]


# =============================================================================
# Host-side weight fusion / padding (done once per parameter set)
# =============================================================================
def fuse_params(params):
    (pw1, pb1, pw2, pb2, bw1, bb1, bw2, bb2,
     ew1, eb1, eg, ebt, ew2, eb2) = params
    f32 = jnp.float32
    hp = jax.lax.Precision.HIGHEST

    # --- stage A: x -> [pair hidden (240) | beta hidden (10) | pad (6)] -------
    wx_a = jnp.zeros((INPUT_DIM, S1), f32)
    bx_a = jnp.zeros((S1,), f32)
    for i in range(N_PAIRS):
        a, b = _pair_cols(i)
        c = i * PAIR_HID
        wx_a = wx_a.at[a, c:c + PAIR_HID].set(pw1[i, 0])
        wx_a = wx_a.at[b, c:c + PAIR_HID].set(pw1[i, 1])
        bx_a = bx_a.at[c:c + PAIR_HID].set(pb1[i])
    c0 = N_PAIRS * PAIR_HID                                 # 240
    wx_a = wx_a.at[INPUT_DIM - 1, c0:c0 + 10].set(bw1[0])
    bx_a = bx_a.at[c0:c0 + 10].set(bb1[0])

    # --- expert layer-1 weights, each expert padded to 128 output lanes -------
    ew1_pad = jnp.zeros((EXPERT_IN, H1W), f32)
    eb1_pad = jnp.zeros((H1W,), f32)
    g_pad = jnp.zeros((H1W,), f32)
    bbn_pad = jnp.zeros((H1W,), f32)
    for e in range(N_EXPERTS):
        c = e * HPAD
        ew1_pad = ew1_pad.at[:, c:c + HID].set(ew1[e])
        eb1_pad = eb1_pad.at[c:c + HID].set(eb1[e])
        g_pad = g_pad.at[c:c + HID].set(eg[e])
        bbn_pad = bbn_pad.at[c:c + HID].set(ebt[e])
    n_emb = N_PAIRS * PAIR_EMB_DIM                          # 60
    e_emb = ew1_pad[:n_emb]                                 # (60, 640)
    e_feat = ew1_pad[n_emb:n_emb + FEAT_DIM]                # (18, 640)
    e_beta = ew1_pad[n_emb + FEAT_DIM:]                     # (20, 640)

    # --- block-diagonal pair layer-2, folded through expert layer-1 -----------
    pw2_bd = jnp.zeros((N_PAIRS * PAIR_HID, n_emb), f32)
    for i in range(N_PAIRS):
        pw2_bd = pw2_bd.at[i * PAIR_HID:(i + 1) * PAIR_HID,
                           i * PAIR_EMB_DIM:(i + 1) * PAIR_EMB_DIM].set(pw2[i])
    pb2_full = pb2.reshape(-1)                              # (60,)

    m1 = jnp.zeros((S1, H1W), f32)
    m1 = m1.at[:c0].set(jnp.dot(pw2_bd, e_emb, precision=hp))
    m1 = m1.at[c0:c0 + 10].set(jnp.dot(bw2, e_beta, precision=hp))

    wx_d = jnp.zeros((INPUT_DIM, H1W), f32).at[:FEAT_DIM].set(e_feat)
    bx_d = (jnp.dot(pb2_full, e_emb, precision=hp)
            + jnp.dot(bb2[0], e_beta, precision=hp) + eb1_pad)

    wx19 = jnp.concatenate([wx_a, wx_d], axis=1)            # (19, 896)
    wx = jnp.zeros((KPAD, WXW), f32).at[:INPUT_DIM].set(wx19)   # lane-dense K=128
    bx = jnp.concatenate([bx_a, bx_d]).reshape(1, WXW)          # (1, 896) f32

    # --- expert layer-2, zero-padded to 128x128 --------------------------------
    w2p = jnp.zeros((N_EXPERTS, HPAD, HPAD), f32)
    b2p = jnp.zeros((N_EXPERTS, HPAD), f32)
    for e in range(N_EXPERTS):
        w2p = w2p.at[e, :HID, :REPR_DIM].set(ew2[e])
        b2p = b2p.at[e, :REPR_DIM].set(eb2[e])

    # bf16 MXU operands; f32 accumulation kept inside the kernels.
    return dict(wx=wx.astype(jnp.bfloat16), bx=bx,
                m1=m1.astype(jnp.bfloat16),
                g_pad=g_pad, bbn_pad=bbn_pad,
                w2p=w2p.astype(jnp.bfloat16), b2p=b2p)


# =============================================================================
# Forward wrapper
# =============================================================================
def mmoe_forward(x, fused, *, tb=None):
    """x: (B, 19) float32 -> (B, N_EXPERTS, REPR_DIM) float32."""
    B = x.shape[0]
    if tb is None:
        tb = 512                      # ~6 MB double-buffered VMEM; fits all defaults
    tb = max(8, min(_round_up(tb, 8), _round_up(B, 8)))
    n_tiles = -(-B // tb)
    if n_tiles > 1 and n_tiles % 2 == 1:
        # keep tile count even so v7x megacore doesn't idle a core for a tile
        n_tiles += 1
        tb = max(8, _round_up(-(-B // n_tiles), 8))
    b_pad = n_tiles * tb
    xp = jnp.pad(x.astype(jnp.float32),
                 ((0, b_pad - B), (0, KPAD - INPUT_DIM)))   # lane-dense K=128

    wx, bx, m1 = fused["wx"], fused["bx"], fused["m1"]
    w2p, b2p = fused["w2p"], fused["b2p"]

    def _const_spec(arr):
        nd = arr.ndim
        return pl.BlockSpec(arr.shape, lambda i, nd=nd: (0,) * nd)

    # Only raise the scoped-VMEM limit when a caller asks for very large tiles
    # (v5e's default is 16 MiB); the 512-row default stays under every default.
    vmem_need = 2 * tb * (KPAD + 3 * H1W) * 4 + (4 << 20)
    vmem_limit = min(vmem_need, 64 << 20) if vmem_need > (16 << 20) else None
    cparams = pltpu.CompilerParams(dimension_semantics=("parallel",),
                                   vmem_limit_bytes=vmem_limit)

    # ---- pass 1: H1 (spilled lane-dense) + masked BN sums ---------------------
    h1, stats = pl.pallas_call(
        functools.partial(_h1_stats_kernel, b_real=B),
        out_shape=(jax.ShapeDtypeStruct((b_pad, H1W), jnp.float32),
                   jax.ShapeDtypeStruct((n_tiles, 8, H1W), jnp.float32)),
        grid=(n_tiles,),
        in_specs=[pl.BlockSpec((tb, KPAD), lambda i: (i, 0)),
                  _const_spec(wx), _const_spec(bx), _const_spec(m1)],
        out_specs=(pl.BlockSpec((tb, H1W), lambda i: (i, 0)),
                   pl.BlockSpec((1, 8, H1W), lambda i: (i, 0, 0))),
        compiler_params=cparams,
    )(xp, wx, bx, m1)

    # exact full-batch training-mode BatchNorm stats, folded to scale/shift.
    # (E[h^2]-E[h]^2 in f32 with a >=0 guard; fine for BN-scale activations.)
    s1 = jnp.sum(stats[:, 0, :], axis=0)
    s2 = jnp.sum(stats[:, 1, :], axis=0)
    mean = s1 / B
    var = jnp.maximum(s2 / B - mean * mean, 0.0)   # biased variance (PyTorch BN train)
    inv = jax.lax.rsqrt(var + BN_EPS)
    scale = (fused["g_pad"] * inv).reshape(1, H1W)
    shift = (fused["bbn_pad"] - mean * fused["g_pad"] * inv).reshape(1, H1W)

    # ---- pass 2: BN + LeakyReLU + expert layer-2, lane-dense output ----------
    out = pl.pallas_call(
        _expert_kernel,
        out_shape=jax.ShapeDtypeStruct((b_pad, H1W), jnp.float32),
        grid=(n_tiles,),
        in_specs=[pl.BlockSpec((tb, H1W), lambda i: (i, 0)),
                  _const_spec(scale), _const_spec(shift),
                  _const_spec(w2p), _const_spec(b2p)],
        out_specs=pl.BlockSpec((tb, H1W), lambda i: (i, 0)),
        compiler_params=cparams,
    )(h1, scale, shift, w2p, b2p)

    # free reshape + trim: matches torch.stack(dim=0).transpose(0, 1)
    return out.reshape(b_pad, N_EXPERTS, HPAD)[:B, :, :REPR_DIM]


# =============================================================================
# Synthetic parameters + pure-JAX reference (for the self-check)
# =============================================================================
def init_params(key):
    def lin(k, fan_in, shape):
        return jax.random.normal(k, shape, jnp.float32) / jnp.sqrt(float(fan_in))

    ks = jax.random.split(key, 8)
    pw1 = lin(ks[0], 2, (N_PAIRS, 2, PAIR_HID))
    pb1 = jnp.zeros((N_PAIRS, PAIR_HID), jnp.float32)
    pw2 = lin(ks[1], PAIR_HID, (N_PAIRS, PAIR_HID, PAIR_EMB_DIM))
    pb2 = jnp.zeros((N_PAIRS, PAIR_EMB_DIM), jnp.float32)
    bw1 = lin(ks[2], 1, (1, 10))
    bb1 = jnp.zeros((1, 10), jnp.float32)
    bw2 = lin(ks[3], 10, (10, 20))
    bb2 = jnp.zeros((1, 20), jnp.float32)
    ew1 = lin(ks[4], EXPERT_IN, (N_EXPERTS, EXPERT_IN, HID))
    eb1 = jnp.zeros((N_EXPERTS, HID), jnp.float32)
    eg = jnp.ones((N_EXPERTS, HID), jnp.float32)
    ebt = jnp.zeros((N_EXPERTS, HID), jnp.float32)
    ew2 = lin(ks[5], HID, (N_EXPERTS, HID, REPR_DIM))
    eb2 = jnp.zeros((N_EXPERTS, REPR_DIM), jnp.float32)
    return (pw1, pb1, pw2, pb2, bw1, bb1, bw2, bb2,
            ew1, eb1, eg, ebt, ew2, eb2)


def mmoe_reference(x, params):
    """Straightforward JAX translation of the PyTorch forward (f32, HIGHEST precision)."""
    (pw1, pb1, pw2, pb2, bw1, bb1, bw2, bb2,
     ew1, eb1, eg, ebt, ew2, eb2) = params
    hp = jax.lax.Precision.HIGHEST
    embs = []
    for i in range(N_PAIRS):
        a, b = _pair_cols(i)
        pair = jnp.stack([x[:, a], x[:, b]], axis=1)
        h = _leaky(jnp.dot(pair, pw1[i], precision=hp) + pb1[i])
        embs.append(jnp.dot(h, pw2[i], precision=hp) + pb2[i])
    emb = jnp.concatenate(embs, axis=1)
    bh = _leaky(jnp.dot(x[:, -1:], bw1, precision=hp) + bb1)
    beta = jnp.dot(bh, bw2, precision=hp) + bb2
    inp = jnp.concatenate([emb, x[:, :FEAT_DIM], beta], axis=1)
    outs = []
    for e in range(N_EXPERTS):
        h = jnp.dot(inp, ew1[e], precision=hp) + eb1[e]
        mu = jnp.mean(h, axis=0)
        var = jnp.mean((h - mu) ** 2, axis=0)
        h = (h - mu) * jax.lax.rsqrt(var + BN_EPS) * eg[e] + ebt[e]
        h = _leaky(h)
        outs.append(jnp.dot(h, ew2[e], precision=hp) + eb2[e])
    return jnp.transpose(jnp.stack(outs, axis=0), (1, 0, 2))


if __name__ == "__main__":
    key = jax.random.PRNGKey(0)
    kx, kp = jax.random.split(key)

    B = 20                                            # small batch for the test
    x = jax.random.normal(kx, (B, INPUT_DIM), jnp.float32)
    params = init_params(kp)
    fused = fuse_params(params)

    # tb=8 exercises the multi-tile grid (4 even tiles incl. one fully padded)
    # plus the padded-row masking path.
    fwd = jax.jit(lambda xx, ff: mmoe_forward(xx, ff, tb=8))
    out = jax.block_until_ready(fwd(x, fused))

    assert out.shape == (B, N_EXPERTS, REPR_DIM), out.shape
    assert out.dtype == jnp.float32
    assert bool(jnp.all(jnp.isfinite(out)))

    ref = jax.block_until_ready(mmoe_reference(x, params))
    max_err = float(jnp.max(jnp.abs(out - ref)))
    # bf16 MXU operands (f32 accumulation) drift slightly vs the f32 reference.
    assert max_err < 1e-1, f"max abs err vs reference: {max_err}"

    print("KERNEL_OK")
</pallas_src>

<mosaic_0001>
module attributes {stable_mosaic.version = 11 : i64} {
  func.func @_h1_stats_kernel(%arg0: i32, %arg1: memref<8x128xf32, #tpu.memory_space<vmem>>, %arg2: memref<128x896xbf16, #tpu.memory_space<vmem>>, %arg3: memref<1x896xf32, #tpu.memory_space<vmem>>, %arg4: memref<256x640xbf16, #tpu.memory_space<vmem>>, %arg5: memref<8x640xf32, #tpu.memory_space<vmem>>, %arg6: memref<1x8x640xf32, #tpu.memory_space<vmem>>) attributes {dimension_semantics = [#tpu.dimension_semantics<parallel>], iteration_bounds = array<i64: 4>, scalar_prefetch = 0 : i64, scratch_operands = 0 : i64, tpu.core_type = #tpu.core_type<tc>, window_params = [{transform_indices = @transform_0, window_bounds = array<i64: 8, 128>}, {pipeline_mode = #tpu.pipeline_mode<synchronous>, transform_indices = @transform_1, window_bounds = array<i64: 128, 896>}, {pipeline_mode = #tpu.pipeline_mode<synchronous>, transform_indices = @transform_2, window_bounds = array<i64: 1, 896>}, {pipeline_mode = #tpu.pipeline_mode<synchronous>, transform_indices = @transform_3, window_bounds = array<i64: 256, 640>}, {transform_indices = @transform_4, window_bounds = array<i64: 8, 640>}, {transform_indices = @transform_5, window_bounds = array<i64: 1, 8, 640>}]} {
    %c0 = arith.constant 0 : index
    %c0_0 = arith.constant 0 : index
    %0 = vector.load %arg1[%c0, %c0_0] : memref<8x128xf32, #tpu.memory_space<vmem>>, vector<8x128xf32>
    %1 = arith.truncf %0 : vector<8x128xf32> to vector<8x128xbf16>
    %c0_1 = arith.constant 0 : index
    %c0_2 = arith.constant 0 : index
    %2 = vector.load %arg2[%c0_1, %c0_2] : memref<128x896xbf16, #tpu.memory_space<vmem>>, vector<128x896xbf16>
    %cst = arith.constant dense<0.000000e+00> : vector<8x896xf32>
    %3 = tpu.matmul %1, %2, %cst {dimension_numbers = #tpu.dot_dimension_numbers<[1], [0], [0], [1], [0, 0, 1, 1], [], []>} : vector<8x128xbf16>, vector<128x896xbf16>, vector<8x896xf32> -> vector<8x896xf32>
    %c0_3 = arith.constant 0 : index
    %c0_4 = arith.constant 0 : index
    %4 = vector.load %arg3[%c0_3, %c0_4] : memref<1x896xf32, #tpu.memory_space<vmem>>, vector<1x896xf32>
    %5 = vector.broadcast %4 : vector<1x896xf32> to vector<8x896xf32>
    %6 = arith.addf %3, %5 : vector<8x896xf32>
    %7 = vector.extract_strided_slice %6 {offsets = [0, 0], sizes = [8, 256], strides = [1, 1]} : vector<8x896xf32> to vector<8x256xf32>
    %cst_5 = arith.constant 0.000000e+00 : f32
    %8 = vector.broadcast %cst_5 : f32 to vector<8x256xf32>
    %9 = arith.cmpf ogt, %7, %8 : vector<8x256xf32>
    %cst_6 = arith.constant 0.00999999977 : f32
    %10 = vector.broadcast %cst_6 : f32 to vector<8x256xf32>
    %11 = arith.mulf %10, %7 : vector<8x256xf32>
    %12 = arith.select %9, %7, %11 : vector<8x256xi1>, vector<8x256xf32>
    %13 = arith.truncf %12 : vector<8x256xf32> to vector<8x256xbf16>
    %14 = vector.extract_strided_slice %6 {offsets = [0, 256], sizes = [8, 640], strides = [1, 1]} : vector<8x896xf32> to vector<8x640xf32>
    %c0_7 = arith.constant 0 : index
    %c0_8 = arith.constant 0 : index
    %15 = vector.load %arg4[%c0_7, %c0_8] : memref<256x640xbf16, #tpu.memory_space<vmem>>, vector<256x640xbf16>
    %cst_9 = arith.constant dense<0.000000e+00> : vector<8x640xf32>
    %16 = tpu.matmul %13, %15, %cst_9 {dimension_numbers = #tpu.dot_dimension_numbers<[1], [0], [0], [1], [0, 0, 1, 1], [], []>} : vector<8x256xbf16>, vector<256x640xbf16>, vector<8x640xf32> -> vector<8x640xf32>
    %17 = arith.addf %14, %16 : vector<8x640xf32>
    %c0_10 = arith.constant 0 : index
    %c0_11 = arith.constant 0 : index
    %18 = vector.load %arg5[%c0_10, %c0_11] : memref<8x640xf32, #tpu.memory_space<vmem>>, vector<8x640xf32>
    tpu.vector_store %arg5[%c0_10, %c0_11], %17 {strides = array<i32>} : memref<8x640xf32, #tpu.memory_space<vmem>>, vector<8x640xf32>,
    %19 = tpu.iota {dimensions = array<i32: 0>} : vector<8x1xi32>
    %c8_i32 = arith.constant 8 : i32
    %20 = arith.muli %arg0, %c8_i32 : i32
    %21 = vector.broadcast %20 : i32 to vector<8x1xi32>
    %22 = arith.addi %19, %21 : vector<8x1xi32>
    %c20_i32 = arith.constant 20 : i32
    %23 = vector.broadcast %c20_i32 : i32 to vector<8x1xi32>
    %24 = arith.cmpi slt, %22, %23 : vector<8x1xi32>
    %cst_12 = arith.constant 0.000000e+00 : f32
    %25 = vector.shape_cast %24 : vector<8x1xi1> to vector<8x1xi1>
    %26 = vector.broadcast %25 : vector<8x1xi1> to vector<8x640xi1>
    %27 = vector.broadcast %cst_12 : f32 to vector<8x640xf32>
    %28 = arith.select %26, %17, %27 : vector<8x640xi1>, vector<8x640xf32>
    %cst_13 = arith.constant 0.000000e+00 : f32
    %29 = vector.broadcast %cst_13 : f32 to vector<1x8x640xf32>
    %c0_14 = arith.constant 0 : index
    %c0_15 = arith.constant 0 : index
    %c0_16 = arith.constant 0 : index
    %30 = vector.load %arg6[%c0_14, %c0_15, %c0_16] : memref<1x8x640xf32, #tpu.memory_space<vmem>>, vector<1x8x640xf32>
    tpu.vector_store %arg6[%c0_14, %c0_15, %c0_16], %29 {strides = array<i32>} : memref<1x8x640xf32, #tpu.memory_space<vmem>>, vector<1x8x640xf32>,
    %cst_17 = arith.constant dense<0.000000e+00> : vector<640xf32>
    %31 = vector.multi_reduction <add>, %28, %cst_17 [0] : vector<8x640xf32> to vector<640xf32>
    %32 = vector.shape_cast %31 : vector<640xf32> to vector<1x640xf32>
    %c0_18 = arith.constant 0 : index
    %c0_19 = arith.constant 0 : index
    %c0_20 = arith.constant 0 : index
    %33 = vector.load %arg6[%c0_18, %c0_19, %c0_20] : memref<1x8x640xf32, #tpu.memory_space<vmem>>, vector<1x1x640xf32>
    %34 = vector.shape_cast %33 : vector<1x1x640xf32> to vector<1x640xf32>
    %35 = vector.shape_cast %32 : vector<1x640xf32> to vector<1x1x640xf32>
    tpu.vector_store %arg6[%c0_18, %c0_19, %c0_20], %35 {strides = array<i32>} : memref<1x8x640xf32, #tpu.memory_space<vmem>>, vector<1x1x640xf32>,
    %36 = arith.mulf %28, %28 : vector<8x640xf32>
    %cst_21 = arith.constant dense<0.000000e+00> : vector<640xf32>
    %37 = vector.multi_reduction <add>, %36, %cst_21 [0] : vector<8x640xf32> to vector<640xf32>
    %38 = vector.shape_cast %37 : vector<640xf32> to vector<1x640xf32>
    %c0_22 = arith.constant 0 : index
    %c1 = arith.constant 1 : index
    %c0_23 = arith.constant 0 : index
    %39 = vector.load %arg6[%c0_22, %c1, %c0_23] : memref<1x8x640xf32, #tpu.memory_space<vmem>>, vector<1x1x640xf32>
    %40 = vector.shape_cast %39 : vector<1x1x640xf32> to vector<1x640xf32>
    %41 = vector.shape_cast %38 : vector<1x640xf32> to vector<1x1x640xf32>
    tpu.vector_store %arg6[%c0_22, %c1, %c0_23], %41 {strides = array<i32>} : memref<1x8x640xf32, #tpu.memory_space<vmem>>, vector<1x1x640xf32>,
    return
  }
  func.func @transform_0(%arg0: i32) -> (i32, i32) {
    %c0_i32 = arith.constant 0 : i32
    %c0_i32_0 = arith.constant 0 : i32
    return %arg0, %c0_i32 : i32, i32
  }
  func.func @transform_1(%arg0: i32) -> (i32, i32) {
    %c0_i32 = arith.constant 0 : i32
    %c0_i32_0 = arith.constant 0 : i32
    %c0_i32_1 = arith.constant 0 : i32
    return %c0_i32, %c0_i32_0 : i32, i32
  }
  func.func @transform_2(%arg0: i32) -> (i32, i32) {
    %c0_i32 = arith.constant 0 : i32
    %c0_i32_0 = arith.constant 0 : i32
    %c0_i32_1 = arith.constant 0 : i32
    return %c0_i32, %c0_i32_0 : i32, i32
  }
  func.func @transform_3(%arg0: i32) -> (i32, i32) {
    %c0_i32 = arith.constant 0 : i32
    %c0_i32_0 = arith.constant 0 : i32
    %c0_i32_1 = arith.constant 0 : i32
    return %c0_i32, %c0_i32_0 : i32, i32
  }
  func.func @transform_4(%arg0: i32) -> (i32, i32) {
    %c0_i32 = arith.constant 0 : i32
    %c0_i32_0 = arith.constant 0 : i32
    return %arg0, %c0_i32 : i32, i32
  }
  func.func @transform_5(%arg0: i32) -> (i32, i32, i32) {
    %c0_i32 = arith.constant 0 : i32
    %c0_i32_0 = arith.constant 0 : i32
    %c0_i32_1 = arith.constant 0 : i32
    return %arg0, %c0_i32, %c0_i32_0 : i32, i32, i32
  }
}

module attributes {stable_mosaic.version = 11 : i64} {
  func.func @_expert_kernel(%arg0: i32, %arg1: memref<8x640xf32, #tpu.memory_space<vmem>>, %arg2: memref<1x640xf32, #tpu.memory_space<vmem>>, %arg3: memref<1x640xf32, #tpu.memory_space<vmem>>, %arg4: memref<5x128x128xbf16, #tpu.memory_space<vmem>>, %arg5: memref<5x128xf32, #tpu.memory_space<vmem>>, %arg6: memref<8x640xf32, #tpu.memory_space<vmem>>) attributes {dimension_semantics = [#tpu.dimension_semantics<parallel>], iteration_bounds = array<i64: 4>, scalar_prefetch = 0 : i64, scratch_operands = 0 : i64, tpu.core_type = #tpu.core_type<tc>, window_params = [{transform_indices = @transform_0, window_bounds = array<i64: 8, 640>}, {pipeline_mode = #tpu.pipeline_mode<synchronous>, transform_indices = @transform_1, window_bounds = array<i64: 1, 640>}, {pipeline_mode = #tpu.pipeline_mode<synchronous>, transform_indices = @transform_2, window_bounds = array<i64: 1, 640>}, {pipeline_mode = #tpu.pipeline_mode<synchronous>, transform_indices = @transform_3, window_bounds = array<i64: 5, 128, 128>}, {pipeline_mode = #tpu.pipeline_mode<synchronous>, transform_indices = @transform_4, window_bounds = array<i64: 5, 128>}, {transform_indices = @transform_5, window_bounds = array<i64: 8, 640>}]} {
    %c0 = arith.constant 0 : index
    %c0_0 = arith.constant 0 : index
    %0 = vector.load %arg1[%c0, %c0_0] : memref<8x640xf32, #tpu.memory_space<vmem>>, vector<8x640xf32>
    %c0_1 = arith.constant 0 : index
    %c0_2 = arith.constant 0 : index
    %1 = vector.load %arg2[%c0_1, %c0_2] : memref<1x640xf32, #tpu.memory_space<vmem>>, vector<1x640xf32>
    %2 = vector.broadcast %1 : vector<1x640xf32> to vector<8x640xf32>
    %3 = arith.mulf %0, %2 : vector<8x640xf32>
    %c0_3 = arith.constant 0 : index
    %c0_4 = arith.constant 0 : index
    %4 = vector.load %arg3[%c0_3, %c0_4] : memref<1x640xf32, #tpu.memory_space<vmem>>, vector<1x640xf32>
    %5 = vector.broadcast %4 : vector<1x640xf32> to vector<8x640xf32>
    %6 = arith.addf %3, %5 : vector<8x640xf32>
    %cst = arith.constant 0.000000e+00 : f32
    %7 = vector.broadcast %cst : f32 to vector<8x640xf32>
    %8 = arith.cmpf ogt, %6, %7 : vector<8x640xf32>
    %cst_5 = arith.constant 0.00999999977 : f32
    %9 = vector.broadcast %cst_5 : f32 to vector<8x640xf32>
    %10 = arith.mulf %9, %6 : vector<8x640xf32>
    %11 = arith.select %8, %6, %10 : vector<8x640xi1>, vector<8x640xf32>
    %12 = arith.truncf %11 : vector<8x640xf32> to vector<8x640xbf16>
    %13 = vector.extract_strided_slice %12 {offsets = [0, 0], sizes = [8, 128], strides = [1, 1]} : vector<8x640xbf16> to vector<8x128xbf16>
    %c0_6 = arith.constant 0 : index
    %c0_7 = arith.constant 0 : index
    %c0_8 = arith.constant 0 : index
    %14 = vector.load %arg4[%c0_6, %c0_7, %c0_8] : memref<5x128x128xbf16, #tpu.memory_space<vmem>>, vector<1x128x128xbf16>
    %15 = vector.shape_cast %14 : vector<1x128x128xbf16> to vector<128x128xbf16>
    %cst_9 = arith.constant dense<0.000000e+00> : vector<8x128xf32>
    %16 = tpu.matmul %13, %15, %cst_9 {dimension_numbers = #tpu.dot_dimension_numbers<[1], [0], [0], [1], [0, 0, 1, 1], [], []>} : vector<8x128xbf16>, vector<128x128xbf16>, vector<8x128xf32> -> vector<8x128xf32>
    %c0_10 = arith.constant 0 : index
    %c0_11 = arith.constant 0 : index
    %17 = vector.load %arg5[%c0_10, %c0_11] : memref<5x128xf32, #tpu.memory_space<vmem>>, vector<1x128xf32>
    %18 = vector.broadcast %17 : vector<1x128xf32> to vector<8x128xf32>
    %19 = arith.addf %16, %18 : vector<8x128xf32>
    %c0_12 = arith.constant 0 : index
    %c0_13 = arith.constant 0 : index
    %20 = vector.load %arg6[%c0_12, %c0_13] : memref<8x640xf32, #tpu.memory_space<vmem>>, vector<8x128xf32>
    tpu.vector_store %arg6[%c0_12, %c0_13], %19 {strides = array<i32>} : memref<8x640xf32, #tpu.memory_space<vmem>>, vector<8x128xf32>,
    %21 = vector.extract_strided_slice %12 {offsets = [0, 128], sizes = [8, 128], strides = [1, 1]} : vector<8x640xbf16> to vector<8x128xbf16>
    %c1 = arith.constant 1 : index
    %c0_14 = arith.constant 0 : index
    %c0_15 = arith.constant 0 : index
    %22 = vector.load %arg4[%c1, %c0_14, %c0_15] : memref<5x128x128xbf16, #tpu.memory_space<vmem>>, vector<1x128x128xbf16>
    %23 = vector.shape_cast %22 : vector<1x128x128xbf16> to vector<128x128xbf16>
    %cst_16 = arith.constant dense<0.000000e+00> : vector<8x128xf32>
    %24 = tpu.matmul %21, %23, %cst_16 {dimension_numbers = #tpu.dot_dimension_numbers<[1], [0], [0], [1], [0, 0, 1, 1], [], []>} : vector<8x128xbf16>, vector<128x128xbf16>, vector<8x128xf32> -> vector<8x128xf32>
    %c1_17 = arith.constant 1 : index
    %c0_18 = arith.constant 0 : index
    %25 = vector.load %arg5[%c1_17, %c0_18] : memref<5x128xf32, #tpu.memory_space<vmem>>, vector<1x128xf32>
    %26 = vector.broadcast %25 : vector<1x128xf32> to vector<8x128xf32>
    %27 = arith.addf %24, %26 : vector<8x128xf32>
    %c0_19 = arith.constant 0 : index
    %c128 = arith.constant 128 : index
    %28 = vector.load %arg6[%c0_19, %c128] : memref<8x640xf32, #tpu.memory_space<vmem>>, vector<8x128xf32>
    tpu.vector_store %arg6[%c0_19, %c128], %27 {strides = array<i32>} : memref<8x640xf32, #tpu.memory_space<vmem>>, vector<8x128xf32>,
    %29 = vector.extract_strided_slice %12 {offsets = [0, 256], sizes = [8, 128], strides = [1, 1]} : vector<8x640xbf16> to vector<8x128xbf16>
    %c2 = arith.constant 2 : index
    %c0_20 = arith.constant 0 : index
    %c0_21 = arith.constant 0 : index
    %30 = vector.load %arg4[%c2, %c0_20, %c0_21] : memref<5x128x128xbf16, #tpu.memory_space<vmem>>, vector<1x128x128xbf16>
    %31 = vector.shape_cast %30 : vector<1x128x128xbf16> to vector<128x128xbf16>
    %cst_22 = arith.constant dense<0.000000e+00> : vector<8x128xf32>
    %32 = tpu.matmul %29, %31, %cst_22 {dimension_numbers = #tpu.dot_dimension_numbers<[1], [0], [0], [1], [0, 0, 1, 1], [], []>} : vector<8x128xbf16>, vector<128x128xbf16>, vector<8x128xf32> -> vector<8x128xf32>
    %c2_23 = arith.constant 2 : index
    %c0_24 = arith.constant 0 : index
    %33 = vector.load %arg5[%c2_23, %c0_24] : memref<5x128xf32, #tpu.memory_space<vmem>>, vector<1x128xf32>
    %34 = vector.broadcast %33 : vector<1x128xf32> to vector<8x128xf32>
    %35 = arith.addf %32, %34 : vector<8x128xf32>
    %c0_25 = arith.constant 0 : index
    %c256 = arith.constant 256 : index
    %36 = vector.load %arg6[%c0_25, %c256] : memref<8x640xf32, #tpu.memory_space<vmem>>, vector<8x128xf32>
    tpu.vector_store %arg6[%c0_25, %c256], %35 {strides = array<i32>} : memref<8x640xf32, #tpu.memory_space<vmem>>, vector<8x128xf32>,
    %37 = vector.extract_strided_slice %12 {offsets = [0, 384], sizes = [8, 128], strides = [1, 1]} : vector<8x640xbf16> to vector<8x128xbf16>
    %c3 = arith.constant 3 : index
    %c0_26 = arith.constant 0 : index
    %c0_27 = arith.constant 0 : index
    %38 = vector.load %arg4[%c3, %c0_26, %c0_27] : memref<5x128x128xbf16, #tpu.memory_space<vmem>>, vector<1x128x128xbf16>
    %39 = vector.shape_cast %38 : vector<1x128x128xbf16> to vector<128x128xbf16>
    %cst_28 = arith.constant dense<0.000000e+00> : vector<8x128xf32>
    %40 = tpu.matmul %37, %39, %cst_28 {dimension_numbers = #tpu.dot_dimension_numbers<[1], [0], [0], [1], [0, 0, 1, 1], [], []>} : vector<8x128xbf16>, vector<128x128xbf16>, vector<8x128xf32> -> vector<8x128xf32>
    %c3_29 = arith.constant 3 : index
    %c0_30 = arith.constant 0 : index
    %41 = vector.load %arg5[%c3_29, %c0_30] : memref<5x128xf32, #tpu.memory_space<vmem>>, vector<1x128xf32>
    %42 = vector.broadcast %41 : vector<1x128xf32> to vector<8x128xf32>
    %43 = arith.addf %40, %42 : vector<8x128xf32>
    %c0_31 = arith.constant 0 : index
    %c384 = arith.constant 384 : index
    %44 = vector.load %arg6[%c0_31, %c384] : memref<8x640xf32, #tpu.memory_space<vmem>>, vector<8x128xf32>
    tpu.vector_store %arg6[%c0_31, %c384], %43 {strides = array<i32>} : memref<8x640xf32, #tpu.memory_space<vmem>>, vector<8x128xf32>,
    %45 = vector.extract_strided_slice %12 {offsets = [0, 512], sizes = [8, 128], strides = [1, 1]} : vector<8x640xbf16> to vector<8x128xbf16>
    %c4 = arith.constant 4 : index
    %c0_32 = arith.constant 0 : index
    %c0_33 = arith.constant 0 : index
    %46 = vector.load %arg4[%c4, %c0_32, %c0_33] : memref<5x128x128xbf16, #tpu.memory_space<vmem>>, vector<1x128x128xbf16>
    %47 = vector.shape_cast %46 : vector<1x128x128xbf16> to vector<128x128xbf16>
    %cst_34 = arith.constant dense<0.000000e+00> : vector<8x128xf32>
    %48 = tpu.matmul %45, %47, %cst_34 {dimension_numbers = #tpu.dot_dimension_numbers<[1], [0], [0], [1], [0, 0, 1, 1], [], []>} : vector<8x128xbf16>, vector<128x128xbf16>, vector<8x128xf32> -> vector<8x128xf32>
    %c4_35 = arith.constant 4 : index
    %c0_36 = arith.constant 0 : index
    %49 = vector.load %arg5[%c4_35, %c0_36] : memref<5x128xf32, #tpu.memory_space<vmem>>, vector<1x128xf32>
    %50 = vector.broadcast %49 : vector<1x128xf32> to vector<8x128xf32>
    %51 = arith.addf %48, %50 : vector<8x128xf32>
    %c0_37 = arith.constant 0 : index
    %c512 = arith.constant 512 : index
    %52 = vector.load %arg6[%c0_37, %c512] : memref<8x640xf32, #tpu.memory_space<vmem>>, vector<8x128xf32>
    tpu.vector_store %arg6[%c0_37, %c512], %51 {strides = array<i32>} : memref<8x640xf32, #tpu.memory_space<vmem>>, vector<8x128xf32>,
    return
  }
  func.func @transform_0(%arg0: i32) -> (i32, i32) {
    %c0_i32 = arith.constant 0 : i32
    %c0_i32_0 = arith.constant 0 : i32
    return %arg0, %c0_i32 : i32, i32
  }
  func.func @transform_1(%arg0: i32) -> (i32, i32) {
    %c0_i32 = arith.constant 0 : i32
    %c0_i32_0 = arith.constant 0 : i32
    %c0_i32_1 = arith.constant 0 : i32
    return %c0_i32, %c0_i32_0 : i32, i32
  }
  func.func @transform_2(%arg0: i32) -> (i32, i32) {
    %c0_i32 = arith.constant 0 : i32
    %c0_i32_0 = arith.constant 0 : i32
    %c0_i32_1 = arith.constant 0 : i32
    return %c0_i32, %c0_i32_0 : i32, i32
  }
  func.func @transform_3(%arg0: i32) -> (i32, i32, i32) {
    %c0_i32 = arith.constant 0 : i32
    %c0_i32_0 = arith.constant 0 : i32
    %c0_i32_1 = arith.constant 0 : i32
    %c0_i32_2 = arith.constant 0 : i32
    return %c0_i32, %c0_i32_0, %c0_i32_1 : i32, i32, i32
  }
  func.func @transform_4(%arg0: i32) -> (i32, i32) {
    %c0_i32 = arith.constant 0 : i32
    %c0_i32_0 = arith.constant 0 : i32
    %c0_i32_1 = arith.constant 0 : i32
    return %c0_i32, %c0_i32_0 : i32, i32
  }
  func.func @transform_5(%arg0: i32) -> (i32, i32) {
    %c0_i32 = arith.constant 0 : i32
    %c0_i32_0 = arith.constant 0 : i32
    return %arg0, %c0_i32 : i32, i32
  }
}

</mosaic_0001>

<llo_original>
// kernel: _lambda_.3
$region0: #{_lambda_.3}
  #allocation0 [shape = 'u32[]', space=smem, size = 0x4, offset = 0x4, fixed_abs, tag = 'smem constant byte address 0x4 - core index']
  #allocation1 [shape = 'u32[144,128]{1,0:T(1,128)}', space=vmem, size = 0x12000, scoped, tag = 'internal scratch']
  %s0 = inlined_call_operand.vmem [shape: f32[32,640], index: 0, kind: input, shape index: {}]
  %s1 = inlined_call_operand.vmem [shape: f32[1,640], index: 1, kind: input, shape index: {}]
  %s2 = inlined_call_operand.vmem [shape: f32[1,640], index: 2, kind: input, shape index: {}]
  %s3 = inlined_call_operand.vmem [shape: bf16[5,128,128], index: 3, kind: input, shape index: {}]
  %s4 = inlined_call_operand.vmem [shape: f32[5,128], index: 4, kind: input, shape index: {}]
  %s5 = inlined_call_operand.vmem [shape: f32[32,640], index: 5, kind: output, shape index: {}]
  %s6 = sld [smem:[#allocation0]]
  $region53: #{_lambda_.3} parent=0
    _
  %s8 = ssub.s32 1, %s6
  %s9 = scalar_select 0, %s8, %s6
  loop: start=0, step=1, limit=6
  $region2: #{_lambda_.3} parent=0 // loop_pre_header
    _
  $region3: #{_lambda_.3} parent=0 // loop_header
    %s11 = sphi 0, %s15
    %p12 = scmp.ge.s32.totalorder %s11, 6
    %s21 = sphi 0, %s23
    %s24 = sphi 0, %s21
    %s25 = sphi 0, %s24
    %s41 = sphi 0, %s25
    %s45 = sphi 0, %s45
    %s47 = sphi 0, %s45
    %s48 = sphi 0, %s47
    %s62 = sphi 0, %s48
    %s66 = sphi 0, %s66
    %s68 = sphi 0, %s66
    %s69 = sphi 0, %s68
    %s83 = sphi 0, %s69
    %s87 = sphi 0, %s87
    %s89 = sphi 0, %s87
    %s90 = sphi 0, %s89
    %s104 = sphi 0, %s90
    %s108 = sphi 0, %s108
    %s110 = sphi 0, %s108
    %s111 = sphi 0, %s110
    %s125 = sphi 0, %s111
    %s131 = sphi 0, %s133
    %s134 = sphi 0, %s131
    %s135 = sphi 0, %s134
    %s151 = sphi 0, %s135
  $region4: #{_lambda_.3} parent=0 // loop_header_branch
    %14 = sbr.rel (%p12) target = $region8
  $region5: #{_lambda_.3} parent=0 // loop_body
    %s16 = ssub.s32 %s11, 1
    %s17 = ssub.s32 %s11, 2
    %s18 = sadd.s32 %s11, 1
    %s19 = ssub.s32 %s11, %s18
    %p20 = scmp.eq.s32.totalorder %s19, 0
    %s22 = sadd.s32 %s21, 1
    %s23 = scalar_select %p20, %s21, %s22
    %p26 = pneg %p20
    %p27 = scmp.eq.s32.totalorder %s11, 3
    %p28 = por %p26, %p27
    %p29 = scmp.ne.s32.totalorder %s21, %s24
    %p30 = scmp.eq.s32.totalorder %s11, 0
    %p31 = por %p29, %p30
    %p32 = scmp.ne.s32.totalorder %s21, %s24
    %p33 = scmp.eq.s32.totalorder %s16, 3
    %p34 = por %p32, %p33
    %p35 = scmp.ne.s32.totalorder %s24, %s25
    %p36 = scmp.eq.s32.totalorder %s16, 0
    %p37 = por %p35, %p36
    %p38 = scmp.ne.s32.totalorder %s24, %s25
    %p39 = scmp.eq.s32.totalorder %s17, 3
    %p40 = por %p38, %p39
    %p42 = scmp.ne.s32.totalorder %s25, %s41
    %p43 = scmp.eq.s32.totalorder %s17, 0
    %p44 = por %p42, %p43
    %s46 = sadd.s32 %s45, 1
    %p49 = scmp.eq.s32.totalorder %s11, 3
    %p50 = scmp.ne.s32.totalorder %s45, %s47
    %p51 = scmp.eq.s32.totalorder %s11, 0
    %p52 = por %p50, %p51
    %p53 = scmp.ne.s32.totalorder %s45, %s47
    %p54 = scmp.eq.s32.totalorder %s16, 3
    %p55 = por %p53, %p54
    %p56 = scmp.ne.s32.totalorder %s47, %s48
    %p57 = scmp.eq.s32.totalorder %s16, 0
    %p58 = por %p56, %p57
    %p59 = scmp.ne.s32.totalorder %s47, %s48
    %p60 = scmp.eq.s32.totalorder %s17, 3
    %p61 = por %p59, %p60
    %p63 = scmp.ne.s32.totalorder %s48, %s62
    %p64 = scmp.eq.s32.totalorder %s17, 0
    %p65 = por %p63, %p64
    %s67 = sadd.s32 %s66, 1
    %p70 = scmp.eq.s32.totalorder %s11, 3
    %p71 = scmp.ne.s32.totalorder %s66, %s68
    %p72 = scmp.eq.s32.totalorder %s11, 0
    %p73 = por %p71, %p72
    %p74 = scmp.ne.s32.totalorder %s66, %s68
    %p75 = scmp.eq.s32.totalorder %s16, 3
    %p76 = por %p74, %p75
    %p77 = scmp.ne.s32.totalorder %s68, %s69
    %p78 = scmp.eq.s32.totalorder %s16, 0
    %p79 = por %p77, %p78
    %p80 = scmp.ne.s32.totalorder %s68, %s69
    %p81 = scmp.eq.s32.totalorder %s17, 3
    %p82 = por %p80, %p81
    %p84 = scmp.ne.s32.totalorder %s69, %s83
    %p85 = scmp.eq.s32.totalorder %s17, 0
    %p86 = por %p84, %p85
    %s88 = sadd.s32 %s87, 1
    %p91 = scmp.eq.s32.totalorder %s11, 3
    %p92 = scmp.ne.s32.totalorder %s87, %s89
    %p93 = scmp.eq.s32.totalorder %s11, 0
    %p94 = por %p92, %p93
    %p95 = scmp.ne.s32.totalorder %s87, %s89
    %p96 = scmp.eq.s32.totalorder %s16, 3
    %p97 = por %p95, %p96
    %p98 = scmp.ne.s32.totalorder %s89, %s90
    %p99 = scmp.eq.s32.totalorder %s16, 0
    %p100 = por %p98, %p99
    %p101 = scmp.ne.s32.totalorder %s89, %s90
    %p102 = scmp.eq.s32.totalorder %s17, 3
    %p103 = por %p101, %p102
    %p105 = scmp.ne.s32.totalorder %s90, %s104
    %p106 = scmp.eq.s32.totalorder %s17, 0
    %p107 = por %p105, %p106
    %s109 = sadd.s32 %s108, 1
    %p112 = scmp.eq.s32.totalorder %s11, 3
    %p113 = scmp.ne.s32.totalorder %s108, %s110
    %p114 = scmp.eq.s32.totalorder %s11, 0
    %p115 = por %p113, %p114
    %p116 = scmp.ne.s32.totalorder %s108, %s110
    %p117 = scmp.eq.s32.totalorder %s16, 3
    %p118 = por %p116, %p117
    %p119 = scmp.ne.s32.totalorder %s110, %s111
    %p120 = scmp.eq.s32.totalorder %s16, 0
    %p121 = por %p119, %p120
    %p122 = scmp.ne.s32.totalorder %s110, %s111
    %p123 = scmp.eq.s32.totalorder %s17, 3
    %p124 = por %p122, %p123
    %p126 = scmp.ne.s32.totalorder %s111, %s125
    %p127 = scmp.eq.s32.totalorder %s17, 0
    %p128 = por %p126, %p127
    %s129 = ssub.s32 %s11, %s18
    %p130 = scmp.eq.s32.totalorder %s129, 0
    %s132 = sadd.s32 %s131, 1
    %s133 = scalar_select %p130, %s131, %s132
    %p136 = pneg %p130
    %p137 = scmp.eq.s32.totalorder %s11, 3
    %p138 = por %p136, %p137
    %p139 = scmp.ne.s32.totalorder %s131, %s134
    %p140 = scmp.eq.s32.totalorder %s11, 0
    %p141 = por %p139, %p140
    %p142 = scmp.ne.s32.totalorder %s131, %s134
    %p143 = scmp.eq.s32.totalorder %s16, 3
    %p144 = por %p142, %p143
    %p145 = scmp.ne.s32.totalorder %s134, %s135
    %p146 = scmp.eq.s32.totalorder %s16, 0
    %p147 = por %p145, %p146
    %p148 = scmp.ne.s32.totalorder %s134, %s135
    %p149 = scmp.eq.s32.totalorder %s17, 3
    %p150 = por %p148, %p149
    %p152 = scmp.ne.s32.totalorder %s135, %s151
    %p153 = scmp.eq.s32.totalorder %s17, 0
    %p154 = por %p152, %p153
    %p155 = scmp.le.s32.totalorder 1, %s11
    %p156 = scmp.lt.s32.totalorder %s11, 5
    %p157 = pnand %p155, %p156
    %p158 = pneg %p157
    // Predicated region
    $region9: #{_lambda_.3} parent=5 // pred_check
      _
    $region10: #{_lambda_.3} parent=5 // pred_check_branch
      %160 = sbr.rel (%p157) target = $region12
    $region11: #{_lambda_.3} parent=5 // pred_region
      %s161 = ssub.s32 %s11, 1
      // Predicated region
      $region13: #{_lambda_.3} parent=11 // pred_check
        %p162 = pneg %p58
      $region14: #{_lambda_.3} parent=11 // pred_check_branch
        %164 = sbr.rel (%p162) target = $region16
      $region15: #{_lambda_.3} parent=11 // pred_region
        _
      $region16: #{_lambda_.3} parent=11 // pred_fallthru
        _
      // Predicated region
      $region17: #{_lambda_.3} parent=11 // pred_check
        %p165 = pneg %p79
      $region18: #{_lambda_.3} parent=11 // pred_check_branch
        %167 = sbr.rel (%p165) target = $region20
      $region19: #{_lambda_.3} parent=11 // pred_region
        _
      $region20: #{_lambda_.3} parent=11 // pred_fallthru
        _
      // Predicated region
      $region21: #{_lambda_.3} parent=11 // pred_check
        %p168 = pneg %p100
      $region22: #{_lambda_.3} parent=11 // pred_check_branch
        %170 = sbr.rel (%p168) target = $region24
      $region23: #{_lambda_.3} parent=11 // pred_region
        _
      $region24: #{_lambda_.3} parent=11 // pred_fallthru
        _
      // Predicated region
      $region25: #{_lambda_.3} parent=11 // pred_check
        %p171 = pneg %p121
      $region26: #{_lambda_.3} parent=11 // pred_check_branch
        %173 = sbr.rel (%p171) target = $region28
      $region27: #{_lambda_.3} parent=11 // pred_region
        _
      $region28: #{_lambda_.3} parent=11 // pred_fallthru
        _
    $region12: #{_lambda_.3} parent=5 // pred_fallthru
      _
    %p174 = scmp.lt.s32.totalorder %s11, 4
    // Predicated region
    $region29: #{_lambda_.3} parent=5 // pred_check
      %p175 = pneg %p174
    $region30: #{_lambda_.3} parent=5 // pred_check_branch
      %177 = sbr.rel (%p175) target = $region32
    $region31: #{_lambda_.3} parent=5 // pred_region
      // Predicated region
      $region33: #{_lambda_.3} parent=31 // pred_check
        %p178 = pneg %p31
      $region34: #{_lambda_.3} parent=31 // pred_check_branch
        %180 = sbr.rel (%p178) target = $region36
      $region35: #{_lambda_.3} parent=31 // pred_region
        %p181 = scmp.lt.s32.totalorder %s11, 3
        %s182 = scalar_select %p181, %s11, 3
        %s183 = smul.addr %s182, 5
        %s184 = smul.addr %s183, 8
        %s185 = scalar_lea.vmem %s0, %s184
      $region36: #{_lambda_.3} parent=31 // pred_fallthru
        _
    $region32: #{_lambda_.3} parent=5 // pred_fallthru
      _
    %p186 = scmp.le.s32.totalorder 1, %s11
    %p187 = scmp.lt.s32.totalorder %s11, 5
    %p188 = pnand %p186, %p187
    %p189 = pneg %p188
    // Predicated region
    $region37: #{_lambda_.3} parent=5 // pred_check
      _
    $region38: #{_lambda_.3} parent=5 // pred_check_branch
      %191 = sbr.rel (%p188) target = $region40
    $region39: #{_lambda_.3} parent=5 // pred_region
      %s192 = ssub.s32 %s11, 1
      %p193 = scmp.lt.s32.totalorder %s16, 3
      %s194 = scalar_select %p193, %s16, 3
      %s195 = smul.addr %s194, 5
      %s196 = smul.addr %s195, 8
      %s197 = scalar_lea.vmem %s0, %s196
      %p198 = pneg %p37
      %p199 = pneg %p34
      %p200 = pneg %p58
      %p201 = pneg %p55
      %p202 = pneg %p79
      %p203 = pneg %p76
      %p204 = pneg %p100
      %p205 = pneg %p97
      %p206 = pneg %p121
      %p207 = pneg %p118
      %p208 = pneg %p147
      %p209 = pneg %p144
      %p210 = scmp.lt.s32.totalorder %s16, 3
      %s211 = scalar_select %p210, %s16, 3
      %s212 = smul.addr %s211, 5
      %s213 = smul.addr %s212, 8
      %s214 = scalar_lea.vmem %s5, %s213
      %p215 = scmp.lt.s32.totalorder %s16, 3
      %s216 = scalar_select %p215, %s16, 3
      %s217 = smul.addr %s216, 5
      %s218 = smul.addr %s217, 8
      %s219 = scalar_lea.vmem %s0, %s218
      %p220 = scmp.lt.s32.totalorder %s16, 3
      %s221 = scalar_select %p220, %s16, 3
      %s222 = smul.addr %s221, 5
      %s223 = smul.addr %s222, 8
      %s224 = scalar_lea.vmem %s5, %s223
      %v226 = vld [vmem:[%s219] sm:$0xff]
      %v227 = vld [vmem:[%s219 + $0x8] sm:$0xff]
      %v228 = vld [vmem:[%s219 + $0x10] sm:$0xff]
      %v229 = vld [vmem:[%s219 + $0x18] sm:$0xff]
      %v230 = vld [vmem:[%s219 + $0x20] sm:$0xff]
      %v231 = vld [vmem:[%s1] sm:$0x1f]
      %v233 = vlaneseq
      %v234 = vshrl.u32 %v233, 7
      %v235 = vsub.s32 0, %v234
      %v236 = vrot.slane %v231, %v235
      %v237 = vlaneseq
      %v238 = vshrl.u32 %v237, 7
      %v239 = vsub.s32 1, %v238
      %v240 = vrot.slane %v231, %v239
      %v241 = vlaneseq
      %v242 = vshrl.u32 %v241, 7
      %v243 = vsub.s32 2, %v242
      %v244 = vrot.slane %v231, %v243
      %v245 = vlaneseq
      %v246 = vshrl.u32 %v245, 7
      %v247 = vsub.s32 3, %v246
      %v248 = vrot.slane %v231, %v247
      %v249 = vlaneseq
      %v250 = vshrl.u32 %v249, 7
      %v251 = vsub.s32 4, %v250
      %v252 = vrot.slane %v231, %v251
      %v258 = vmul.f32 %v226, %v236
      %v259 = vmul.f32 %v227, %v240
      %v260 = vmul.f32 %v228, %v244
      %v261 = vmul.f32 %v229, %v248
      %v262 = vmul.f32 %v230, %v252
      %v263 = vld [vmem:[%s2] sm:$0x1f]
      %v265 = vlaneseq
      %v266 = vshrl.u32 %v265, 7
      %v267 = vsub.s32 0, %v266
      %v268 = vrot.slane %v263, %v267
      %v269 = vlaneseq
      %v270 = vshrl.u32 %v269, 7
      %v271 = vsub.s32 1, %v270
      %v272 = vrot.slane %v263, %v271
      %v273 = vlaneseq
      %v274 = vshrl.u32 %v273, 7
      %v275 = vsub.s32 2, %v274
      %v276 = vrot.slane %v263, %v275
      %v277 = vlaneseq
      %v278 = vshrl.u32 %v277, 7
      %v279 = vsub.s32 3, %v278
      %v280 = vrot.slane %v263, %v279
      %v281 = vlaneseq
      %v282 = vshrl.u32 %v281, 7
      %v283 = vsub.s32 4, %v282
      %v284 = vrot.slane %v263, %v283
      %v290 = vadd.f32 %v258, %v268
      %v291 = vadd.f32 %v259, %v272
      %v292 = vadd.f32 %v260, %v276
      %v293 = vadd.f32 %v261, %v280
      %v294 = vadd.f32 %v262, %v284
      %vm295 = vcmp.gt.f32.partialorder %v290, 0.0
      %vm296 = vcmp.gt.f32.partialorder %v291, 0.0
      %vm297 = vcmp.gt.f32.partialorder %v292, 0.0
      %vm298 = vcmp.gt.f32.partialorder %v293, 0.0
      %vm299 = vcmp.gt.f32.partialorder %v294, 0.0
      %v300 = vmul.f32 %v290, 0.01
      %v301 = vmul.f32 %v291, 0.01
      %v302 = vmul.f32 %v292, 0.01
      %v303 = vmul.f32 %v293, 0.01
      %v304 = vmul.f32 %v294, 0.01
      %v305 = vsel %vm295, %v290, %v300
      %v306 = vsel %vm296, %v291, %v301
      %v307 = vsel %vm297, %v292, %v302
      %v308 = vsel %vm298, %v293, %v303
      %v309 = vsel %vm299, %v294, %v304
      %v310 = vpack.c.bf16 %v305, %v305
      %v311 = vpack.c.bf16 %v306, %v306
      %v312 = vpack.c.bf16 %v307, %v307
      %v313 = vpack.c.bf16 %v308, %v308
      %v314 = vpack.c.bf16 %v309, %v309
      %v315 = vld [vmem:[%s3] sm:$0xf]
      %v316 = vld [vmem:[%s3 + $0x4] sm:$0xf]
      %v317 = vld [vmem:[%s3 + $0x8] sm:$0xf]
      %v318 = vld [vmem:[%s3 + $0xc] sm:$0xf]
      %v319 = vld [vmem:[%s3 + $0x10] sm:$0xf]
      %v320 = vld [vmem:[%s3 + $0x14] sm:$0xf]
      %v321 = vld [vmem:[%s3 + $0x18] sm:$0xf]
      %v322 = vld [vmem:[%s3 + $0x1c] sm:$0xf]
      %v323 = vld [vmem:[%s3 + $0x20] sm:$0xf]
      %v324 = vld [vmem:[%s3 + $0x24] sm:$0xf]
      %v325 = vld [vmem:[%s3 + $0x28] sm:$0xf]
      %v326 = vld [vmem:[%s3 + $0x2c] sm:$0xf]
      %v327 = vld [vmem:[%s3 + $0x30] sm:$0xf]
      %v328 = vld [vmem:[%s3 + $0x34] sm:$0xf]
      %v329 = vld [vmem:[%s3 + $0x38] sm:$0xf]
      %v330 = vld [vmem:[%s3 + $0x3c] sm:$0xf]
      %v331 = vld [vmem:[%s4] sm:$0x1]
      %v332 = vlaneseq
      %v333 = vshrl.u32 %v332, 7
      %v334 = vsub.s32 0, %v333
      %v335 = vrot.slane %v331, %v334
      %v352 = vunpack.c.l.b16 %v315
      %v353 = vunpack.c.l.b16 %v316
      %v354 = vunpack.c.l.b16 %v317
      %v355 = vunpack.c.l.b16 %v318
      %v356 = vunpack.c.l.b16 %v319
      %v357 = vunpack.c.l.b16 %v320
      %v358 = vunpack.c.l.b16 %v321
      %v359 = vunpack.c.l.b16 %v322
      %v360 = vunpack.c.l.b16 %v323
      %v361 = vunpack.c.l.b16 %v324
      %v362 = vunpack.c.l.b16 %v325
      %v363 = vunpack.c.l.b16 %v326
      %v364 = vunpack.c.l.b16 %v327
      %v365 = vunpack.c.l.b16 %v328
      %v366 = vunpack.c.l.b16 %v329
      %v367 = vunpack.c.l.b16 %v330
      %v368 = vpack.c.b16 %v353, %v352
      %v369 = vpack.c.b16 %v355, %v354
      %v370 = vpack.c.b16 %v357, %v356
      %v371 = vpack.c.b16 %v359, %v358
      %v372 = vpack.c.b16 %v361, %v360
      %v373 = vpack.c.b16 %v363, %v362
      %v374 = vpack.c.b16 %v365, %v364
      %v375 = vpack.c.b16 %v367, %v366
      %384 = vmatprep.subr.bf16.mxu0 0
      %385 = vmatpush1.bf16.msra.mxu0 %v375
      %386 = vmatprep.subr.bf16.mxu0 0
      %387 = vmatpush1.bf16.msra.mxu0 %v374
      %388 = vmatprep.subr.bf16.mxu0 0
      %389 = vmatpush1.bf16.msra.mxu0 %v373
      %390 = vmatprep.subr.bf16.mxu0 0
      %391 = vmatpush1.bf16.msra.mxu0 %v372
      %392 = vmatprep.subr.bf16.mxu0 0
      %393 = vmatpush1.bf16.msra.mxu0 %v371
      %394 = vmatprep.subr.bf16.mxu0 0
      %395 = vmatpush1.bf16.msra.mxu0 %v370
      %396 = vmatprep.subr.bf16.mxu0 0
      %397 = vmatpush1.bf16.msra.mxu0 %v369
      %398 = vmatprep.subr.bf16.mxu0 0
      %399 = vmatpush1.bf16.msra.mxu0 %v368
      %400 = vmatprep.subr.bf16.mxu0 0
      %401 = vmatpush2.bf16.msra.mxu0 0
      %402 = vmatprep.subr.bf16.mxu0 0
      %403 = vmatpush2.bf16.msra.mxu0 0
      %404 = vmatprep.subr.bf16.mxu0 0
      %405 = vmatpush2.bf16.msra.mxu0 0
      %406 = vmatprep.subr.bf16.mxu0 0
      %407 = vmatpush2.bf16.msra.mxu0 0
      %408 = vmatprep.subr.bf16.mxu0 0
      %409 = vmatpush2.bf16.msra.mxu0 0
      %410 = vmatprep.subr.bf16.mxu0 0
      %411 = vmatpush2.bf16.msra.mxu0 0
      %412 = vmatprep.subr.bf16.mxu0 0
      %413 = vmatpush2.bf16.msra.mxu0 0
      %414 = vmatprep.subr.bf16.mxu0 0
      %415 = vmatpush2.bf16.msra.mxu0 0
      %416 = vmatprep.mubr.bf16.mxu0 0
      %417 = vmatmul.mubr.bf16.gmra.mxu0 %v310
      %v418 = vpop.f32.mrf.mxu0
      %v419 = vadd.f32 %v335, %v418
      %v420 = vpop.f32.mrf.mxu0
      %v421 = vpop.f32.mrf.mxu0
      %v422 = vpop.f32.mrf.mxu0
      %423 = vdwg.mxu0
      %424 = vst [vmem:[%s224] sm:$0xff] %v419
      %s425 = scalar_lea.vmem %s3, 64
      %v426 = vld [vmem:[%s425] sm:$0xf]
      %v427 = vld [vmem:[%s425 + $0x4] sm:$0xf]
      %v428 = vld [vmem:[%s425 + $0x8] sm:$0xf]
      %v429 = vld [vmem:[%s425 + $0xc] sm:$0xf]
      %v430 = vld [vmem:[%s425 + $0x10] sm:$0xf]
      %v431 = vld [vmem:[%s425 + $0x14] sm:$0xf]
      %v432 = vld [vmem:[%s425 + $0x18] sm:$0xf]
      %v433 = vld [vmem:[%s425 + $0x1c] sm:$0xf]
      %v434 = vld [vmem:[%s425 + $0x20] sm:$0xf]
      %v435 = vld [vmem:[%s425 + $0x24] sm:$0xf]
      %v436 = vld [vmem:[%s425 + $0x28] sm:$0xf]
      %v437 = vld [vmem:[%s425 + $0x2c] sm:$0xf]
      %v438 = vld [vmem:[%s425 + $0x30] sm:$0xf]
      %v439 = vld [vmem:[%s425 + $0x34] sm:$0xf]
      %v440 = vld [vmem:[%s425 + $0x38] sm:$0xf]
      %v441 = vld [vmem:[%s425 + $0x3c] sm:$0xf]
      %v442 = vld [vmem:[%s4 + $0x1] sm:$0x1]
      %v443 = vlaneseq
      %v444 = vshrl.u32 %v443, 7
      %v445 = vsub.s32 0, %v444
      %v446 = vrot.slane %v442, %v445
      %v463 = vunpack.c.l.b16 %v426
      %v464 = vunpack.c.l.b16 %v427
      %v465 = vunpack.c.l.b16 %v428
      %v466 = vunpack.c.l.b16 %v429
      %v467 = vunpack.c.l.b16 %v430
      %v468 = vunpack.c.l.b16 %v431
      %v469 = vunpack.c.l.b16 %v432
      %v470 = vunpack.c.l.b16 %v433
      %v471 = vunpack.c.l.b16 %v434
      %v472 = vunpack.c.l.b16 %v435
      %v473 = vunpack.c.l.b16 %v436
      %v474 = vunpack.c.l.b16 %v437
      %v475 = vunpack.c.l.b16 %v438
      %v476 = vunpack.c.l.b16 %v439
      %v477 = vunpack.c.l.b16 %v440
      %v478 = vunpack.c.l.b16 %v441
      %v479 = vpack.c.b16 %v464, %v463
      %v480 = vpack.c.b16 %v466, %v465
      %v481 = vpack.c.b16 %v468, %v467
      %v482 = vpack.c.b16 %v470, %v469
      %v483 = vpack.c.b16 %v472, %v471
      %v484 = vpack.c.b16 %v474, %v473
      %v485 = vpack.c.b16 %v476, %v475
      %v486 = vpack.c.b16 %v478, %v477
      %495 = vmatprep.subr.bf16.mxu0 0
      %496 = vmatpush1.bf16.msra.mxu0 %v486
      %497 = vmatprep.subr.bf16.mxu0 0
      %498 = vmatpush1.bf16.msra.mxu0 %v485
      %499 = vmatprep.subr.bf16.mxu0 0
      %500 = vmatpush1.bf16.msra.mxu0 %v484
      %501 = vmatprep.subr.bf16.mxu0 0
      %502 = vmatpush1.bf16.msra.mxu0 %v483
      %503 = vmatprep.subr.bf16.mxu0 0
      %504 = vmatpush1.bf16.msra.mxu0 %v482
      %505 = vmatprep.subr.bf16.mxu0 0
      %506 = vmatpush1.bf16.msra.mxu0 %v481
      %507 = vmatprep.subr.bf16.mxu0 0
      %508 = vmatpush1.bf16.msra.mxu0 %v480
      %509 = vmatprep.subr.bf16.mxu0 0
      %510 = vmatpush1.bf16.msra.mxu0 %v479
      %511 = vmatprep.subr.bf16.mxu0 0
      %512 = vmatpush2.bf16.msra.mxu0 0
      %513 = vmatprep.subr.bf16.mxu0 0
      %514 = vmatpush2.bf16.msra.mxu0 0
      %515 = vmatprep.subr.bf16.mxu0 0
      %516 = vmatpush2.bf16.msra.mxu0 0
      %517 = vmatprep.subr.bf16.mxu0 0
      %518 = vmatpush2.bf16.msra.mxu0 0
      %519 = vmatprep.subr.bf16.mxu0 0
      %520 = vmatpush2.bf16.msra.mxu0 0
      %521 = vmatprep.subr.bf16.mxu0 0
      %522 = vmatpush2.bf16.msra.mxu0 0
      %523 = vmatprep.subr.bf16.mxu0 0
      %524 = vmatpush2.bf16.msra.mxu0 0
      %525 = vmatprep.subr.bf16.mxu0 0
      %526 = vmatpush2.bf16.msra.mxu0 0
      %527 = vmatprep.mubr.bf16.mxu0 0
      %528 = vmatmul.mubr.bf16.gmra.mxu0 %v311
      %v529 = vpop.f32.mrf.mxu0
      %v530 = vadd.f32 %v446, %v529
      %v531 = vpop.f32.mrf.mxu0
      %v532 = vpop.f32.mrf.mxu0
      %v533 = vpop.f32.mrf.mxu0
      %534 = vdwg.mxu0
      %535 = vst [vmem:[%s224 + $0x8] sm:$0xff] %v530
      %s536 = scalar_lea.vmem %s3, 128
      %v537 = vld [vmem:[%s536] sm:$0xf]
      %v538 = vld [vmem:[%s536 + $0x4] sm:$0xf]
      %v539 = vld [vmem:[%s536 + $0x8] sm:$0xf]
      %v540 = vld [vmem:[%s536 + $0xc] sm:$0xf]
      %v541 = vld [vmem:[%s536 + $0x10] sm:$0xf]
      %v542 = vld [vmem:[%s536 + $0x14] sm:$0xf]
      %v543 = vld [vmem:[%s536 + $0x18] sm:$0xf]
      %v544 = vld [vmem:[%s536 + $0x1c] sm:$0xf]
      %v545 = vld [vmem:[%s536 + $0x20] sm:$0xf]
      %v546 = vld [vmem:[%s536 + $0x24] sm:$0xf]
      %v547 = vld [vmem:[%s536 + $0x28] sm:$0xf]
      %v548 = vld [vmem:[%s536 + $0x2c] sm:$0xf]
      %v549 = vld [vmem:[%s536 + $0x30] sm:$0xf]
      %v550 = vld [vmem:[%s536 + $0x34] sm:$0xf]
      %v551 = vld [vmem:[%s536 + $0x38] sm:$0xf]
      %v552 = vld [vmem:[%s536 + $0x3c] sm:$0xf]
      %v553 = vld [vmem:[%s4 + $0x2] sm:$0x1]
      %v554 = vlaneseq
      %v555 = vshrl.u32 %v554, 7
      %v556 = vsub.s32 0, %v555
      %v557 = vrot.slane %v553, %v556
      %v574 = vunpack.c.l.b16 %v537
      %v575 = vunpack.c.l.b16 %v538
      %v576 = vunpack.c.l.b16 %v539
      %v577 = vunpack.c.l.b16 %v540
      %v578 = vunpack.c.l.b16 %v541
      %v579 = vunpack.c.l.b16 %v542
      %v580 = vunpack.c.l.b16 %v543
      %v581 = vunpack.c.l.b16 %v544
      %v582 = vunpack.c.l.b16 %v545
      %v583 = vunpack.c.l.b16 %v546
      %v584 = vunpack.c.l.b16 %v547
      %v585 = vunpack.c.l.b16 %v548
      %v586 = vunpack.c.l.b16 %v549
      %v587 = vunpack.c.l.b16 %v550
      %v588 = vunpack.c.l.b16 %v551
      %v589 = vunpack.c.l.b16 %v552
      %v590 = vpack.c.b16 %v575, %v574
      %v591 = vpack.c.b16 %v577, %v576
      %v592 = vpack.c.b16 %v579, %v578
      %v593 = vpack.c.b16 %v581, %v580
      %v594 = vpack.c.b16 %v583, %v582
      %v595 = vpack.c.b16 %v585, %v584
      %v596 = vpack.c.b16 %v587, %v586
      %v597 = vpack.c.b16 %v589, %v588
      %606 = vmatprep.subr.bf16.mxu0 0
      %607 = vmatpush1.bf16.msra.mxu0 %v597
      %608 = vmatprep.subr.bf16.mxu0 0
      %609 = vmatpush1.bf16.msra.mxu0 %v596
      %610 = vmatprep.subr.bf16.mxu0 0
      %611 = vmatpush1.bf16.msra.mxu0 %v595
      %612 = vmatprep.subr.bf16.mxu0 0
      %613 = vmatpush1.bf16.msra.mxu0 %v594
      %614 = vmatprep.subr.bf16.mxu0 0
      %615 = vmatpush1.bf16.msra.mxu0 %v593
      %616 = vmatprep.subr.bf16.mxu0 0
      %617 = vmatpush1.bf16.msra.mxu0 %v592
      %618 = vmatprep.subr.bf16.mxu0 0
      %619 = vmatpush1.bf16.msra.mxu0 %v591
      %620 = vmatprep.subr.bf16.mxu0 0
      %621 = vmatpush1.bf16.msra.mxu0 %v590
      %622 = vmatprep.subr.bf16.mxu0 0
      %623 = vmatpush2.bf16.msra.mxu0 0
      %624 = vmatprep.subr.bf16.mxu0 0
      %625 = vmatpush2.bf16.msra.mxu0 0
      %626 = vmatprep.subr.bf16.mxu0 0
      %627 = vmatpush2.bf16.msra.mxu0 0
      %628 = vmatprep.subr.bf16.mxu0 0
      %629 = vmatpush2.bf16.msra.mxu0 0
      %630 = vmatprep.subr.bf16.mxu0 0
      %631 = vmatpush2.bf16.msra.mxu0 0
      %632 = vmatprep.subr.bf16.mxu0 0
      %633 = vmatpush2.bf16.msra.mxu0 0
      %634 = vmatprep.subr.bf16.mxu0 0
      %635 = vmatpush2.bf16.msra.mxu0 0
      %636 = vmatprep.subr.bf16.mxu0 0
      %637 = vmatpush2.bf16.msra.mxu0 0
      %638 = vmatprep.mubr.bf16.mxu0 0
      %639 = vmatmul.mubr.bf16.gmra.mxu0 %v312
      %v640 = vpop.f32.mrf.mxu0
      %v641 = vadd.f32 %v557, %v640
      %v642 = vpop.f32.mrf.mxu0
      %v643 = vpop.f32.mrf.mxu0
      %v644 = vpop.f32.mrf.mxu0
      %645 = vdwg.mxu0
      %646 = vst [vmem:[%s224 + $0x10] sm:$0xff] %v641
      %s647 = scalar_lea.vmem %s3, 192
      %v648 = vld [vmem:[%s647] sm:$0xf]
      %v649 = vld [vmem:[%s647 + $0x4] sm:$0xf]
      %v650 = vld [vmem:[%s647 + $0x8] sm:$0xf]
      %v651 = vld [vmem:[%s647 + $0xc] sm:$0xf]
      %v652 = vld [vmem:[%s647 + $0x10] sm:$0xf]
      %v653 = vld [vmem:[%s647 + $0x14] sm:$0xf]
      %v654 = vld [vmem:[%s647 + $0x18] sm:$0xf]
      %v655 = vld [vmem:[%s647 + $0x1c] sm:$0xf]
      %v656 = vld [vmem:[%s647 + $0x20] sm:$0xf]
      %v657 = vld [vmem:[%s647 + $0x24] sm:$0xf]
      %v658 = vld [vmem:[%s647 + $0x28] sm:$0xf]
      %v659 = vld [vmem:[%s647 + $0x2c] sm:$0xf]
      %v660 = vld [vmem:[%s647 + $0x30] sm:$0xf]
      %v661 = vld [vmem:[%s647 + $0x34] sm:$0xf]
      %v662 = vld [vmem:[%s647 + $0x38] sm:$0xf]
      %v663 = vld [vmem:[%s647 + $0x3c] sm:$0xf]
      %v664 = vld [vmem:[%s4 + $0x3] sm:$0x1]
      %v665 = vlaneseq
      %v666 = vshrl.u32 %v665, 7
      %v667 = vsub.s32 0, %v666
      %v668 = vrot.slane %v664, %v667
      %v685 = vunpack.c.l.b16 %v648
      %v686 = vunpack.c.l.b16 %v649
      %v687 = vunpack.c.l.b16 %v650
      %v688 = vunpack.c.l.b16 %v651
      %v689 = vunpack.c.l.b16 %v652
      %v690 = vunpack.c.l.b16 %v653
      %v691 = vunpack.c.l.b16 %v654
      %v692 = vunpack.c.l.b16 %v655
      %v693 = vunpack.c.l.b16 %v656
      %v694 = vunpack.c.l.b16 %v657
      %v695 = vunpack.c.l.b16 %v658
      %v696 = vunpack.c.l.b16 %v659
      %v697 = vunpack.c.l.b16 %v660
      %v698 = vunpack.c.l.b16 %v661
      %v699 = vunpack.c.l.b16 %v662
      %v700 = vunpack.c.l.b16 %v663
      %v701 = vpack.c.b16 %v686, %v685
      %v702 = vpack.c.b16 %v688, %v687
      %v703 = vpack.c.b16 %v690, %v689
      %v704 = vpack.c.b16 %v692, %v691
      %v705 = vpack.c.b16 %v694, %v693
      %v706 = vpack.c.b16 %v696, %v695
      %v707 = vpack.c.b16 %v698, %v697
      %v708 = vpack.c.b16 %v700, %v699
      %717 = vmatprep.subr.bf16.mxu0 0
      %718 = vmatpush1.bf16.msra.mxu0 %v708
      %719 = vmatprep.subr.bf16.mxu0 0
      %720 = vmatpush1.bf16.msra.mxu0 %v707
      %721 = vmatprep.subr.bf16.mxu0 0
      %722 = vmatpush1.bf16.msra.mxu0 %v706
      %723 = vmatprep.subr.bf16.mxu0 0
      %724 = vmatpush1.bf16.msra.mxu0 %v705
      %725 = vmatprep.subr.bf16.mxu0 0
      %726 = vmatpush1.bf16.msra.mxu0 %v704
      %727 = vmatprep.subr.bf16.mxu0 0
      %728 = vmatpush1.bf16.msra.mxu0 %v703
      %729 = vmatprep.subr.bf16.mxu0 0
      %730 = vmatpush1.bf16.msra.mxu0 %v702
      %731 = vmatprep.subr.bf16.mxu0 0
      %732 = vmatpush1.bf16.msra.mxu0 %v701
      %733 = vmatprep.subr.bf16.mxu0 0
      %734 = vmatpush2.bf16.msra.mxu0 0
      %735 = vmatprep.subr.bf16.mxu0 0
      %736 = vmatpush2.bf16.msra.mxu0 0
      %737 = vmatprep.subr.bf16.mxu0 0
      %738 = vmatpush2.bf16.msra.mxu0 0
      %739 = vmatprep.subr.bf16.mxu0 0
      %740 = vmatpush2.bf16.msra.mxu0 0
      %741 = vmatprep.subr.bf16.mxu0 0
      %742 = vmatpush2.bf16.msra.mxu0 0
      %743 = vmatprep.subr.bf16.mxu0 0
      %744 = vmatpush2.bf16.msra.mxu0 0
      %745 = vmatprep.subr.bf16.mxu0 0
      %746 = vmatpush2.bf16.msra.mxu0 0
      %747 = vmatprep.subr.bf16.mxu0 0
      %748 = vmatpush2.bf16.msra.mxu0 0
      %749 = vmatprep.mubr.bf16.mxu0 0
      %750 = vmatmul.mubr.bf16.gmra.mxu0 %v313
      %v751 = vpop.f32.mrf.mxu0
      %v752 = vadd.f32 %v668, %v751
      %v753 = vpop.f32.mrf.mxu0
      %v754 = vpop.f32.mrf.mxu0
      %v755 = vpop.f32.mrf.mxu0
      %756 = vdwg.mxu0
      %757 = vst [vmem:[%s224 + $0x18] sm:$0xff] %v752
      %s758 = scalar_lea.vmem %s3, 256
      %v759 = vld [vmem:[%s758] sm:$0xf]
      %v760 = vld [vmem:[%s758 + $0x4] sm:$0xf]
      %v761 = vld [vmem:[%s758 + $0x8] sm:$0xf]
      %v762 = vld [vmem:[%s758 + $0xc] sm:$0xf]
      %v763 = vld [vmem:[%s758 + $0x10] sm:$0xf]
      %v764 = vld [vmem:[%s758 + $0x14] sm:$0xf]
      %v765 = vld [vmem:[%s758 + $0x18] sm:$0xf]
      %v766 = vld [vmem:[%s758 + $0x1c] sm:$0xf]
      %v767 = vld [vmem:[%s758 + $0x20] sm:$0xf]
      %v768 = vld [vmem:[%s758 + $0x24] sm:$0xf]
      %v769 = vld [vmem:[%s758 + $0x28] sm:$0xf]
      %v770 = vld [vmem:[%s758 + $0x2c] sm:$0xf]
      %v771 = vld [vmem:[%s758 + $0x30] sm:$0xf]
      %v772 = vld [vmem:[%s758 + $0x34] sm:$0xf]
      %v773 = vld [vmem:[%s758 + $0x38] sm:$0xf]
      %v774 = vld [vmem:[%s758 + $0x3c] sm:$0xf]
      %v775 = vld [vmem:[%s4 + $0x4] sm:$0x1]
      %v776 = vlaneseq
      %v777 = vshrl.u32 %v776, 7
      %v778 = vsub.s32 0, %v777
      %v779 = vrot.slane %v775, %v778
      %v796 = vunpack.c.l.b16 %v759
      %v797 = vunpack.c.l.b16 %v760
      %v798 = vunpack.c.l.b16 %v761
      %v799 = vunpack.c.l.b16 %v762
      %v800 = vunpack.c.l.b16 %v763
      %v801 = vunpack.c.l.b16 %v764
      %v802 = vunpack.c.l.b16 %v765
      %v803 = vunpack.c.l.b16 %v766
      %v804 = vunpack.c.l.b16 %v767
      %v805 = vunpack.c.l.b16 %v768
      %v806 = vunpack.c.l.b16 %v769
      %v807 = vunpack.c.l.b16 %v770
      %v808 = vunpack.c.l.b16 %v771
      %v809 = vunpack.c.l.b16 %v772
      %v810 = vunpack.c.l.b16 %v773
      %v811 = vunpack.c.l.b16 %v774
      %v812 = vpack.c.b16 %v797, %v796
      %v813 = vpack.c.b16 %v799, %v798
      %v814 = vpack.c.b16 %v801, %v800
      %v815 = vpack.c.b16 %v803, %v802
      %v816 = vpack.c.b16 %v805, %v804
      %v817 = vpack.c.b16 %v807, %v806
      %v818 = vpack.c.b16 %v809, %v808
      %v819 = vpack.c.b16 %v811, %v810
      %828 = vmatprep.subr.bf16.mxu0 0
      %829 = vmatpush1.bf16.msra.mxu0 %v819
      %830 = vmatprep.subr.bf16.mxu0 0
      %831 = vmatpush1.bf16.msra.mxu0 %v818
      %832 = vmatprep.subr.bf16.mxu0 0
      %833 = vmatpush1.bf16.msra.mxu0 %v817
      %834 = vmatprep.subr.bf16.mxu0 0
      %835 = vmatpush1.bf16.msra.mxu0 %v816
      %836 = vmatprep.subr.bf16.mxu0 0
      %837 = vmatpush1.bf16.msra.mxu0 %v815
      %838 = vmatprep.subr.bf16.mxu0 0
      %839 = vmatpush1.bf16.msra.mxu0 %v814
      %840 = vmatprep.subr.bf16.mxu0 0
      %841 = vmatpush1.bf16.msra.mxu0 %v813
      %842 = vmatprep.subr.bf16.mxu0 0
      %843 = vmatpush1.bf16.msra.mxu0 %v812
      %844 = vmatprep.subr.bf16.mxu0 0
      %845 = vmatpush2.bf16.msra.mxu0 0
      %846 = vmatprep.subr.bf16.mxu0 0
      %847 = vmatpush2.bf16.msra.mxu0 0
      %848 = vmatprep.subr.bf16.mxu0 0
      %849 = vmatpush2.bf16.msra.mxu0 0
      %850 = vmatprep.subr.bf16.mxu0 0
      %851 = vmatpush2.bf16.msra.mxu0 0
      %852 = vmatprep.subr.bf16.mxu0 0
      %853 = vmatpush2.bf16.msra.mxu0 0
      %854 = vmatprep.subr.bf16.mxu0 0
      %855 = vmatpush2.bf16.msra.mxu0 0
      %856 = vmatprep.subr.bf16.mxu0 0
      %857 = vmatpush2.bf16.msra.mxu0 0
      %858 = vmatprep.subr.bf16.mxu0 0
      %859 = vmatpush2.bf16.msra.mxu0 0
      %860 = vmatprep.mubr.bf16.mxu0 0
      %861 = vmatmul.mubr.bf16.gmra.mxu0 %v314
      %v862 = vpop.f32.mrf.mxu0
      %v863 = vadd.f32 %v779, %v862
      %v864 = vpop.f32.mrf.mxu0
      %v865 = vpop.f32.mrf.mxu0
      %v866 = vpop.f32.mrf.mxu0
      %867 = vdwg.mxu0
      %868 = vst [vmem:[%s224 + $0x20] sm:$0xff] %v863
      %p869 = scmp.lt.s32.totalorder %s16, 3
      %s870 = scalar_select %p869, %s16, 3
      %s871 = smul.addr %s870, 5
      %s872 = smul.addr %s871, 8
      %s873 = scalar_lea.vmem %s5, %s872
      // Predicated region
      $region41: #{_lambda_.3} parent=39 // pred_check
        %p874 = pneg %p144
      $region42: #{_lambda_.3} parent=39 // pred_check_branch
        %876 = sbr.rel (%p874) target = $region44
      $region43: #{_lambda_.3} parent=39 // pred_region
        _
      $region44: #{_lambda_.3} parent=39 // pred_fallthru
        _
    $region40: #{_lambda_.3} parent=5 // pred_fallthru
      _
    %p877 = scmp.le.s32.totalorder 2, %s11
    // Predicated region
    $region45: #{_lambda_.3} parent=5 // pred_check
      %p878 = pneg %p877
    $region46: #{_lambda_.3} parent=5 // pred_check_branch
      %880 = sbr.rel (%p878) target = $region48
    $region47: #{_lambda_.3} parent=5 // pred_region
      %s881 = ssub.s32 %s11, 2
      // Predicated region
      $region49: #{_lambda_.3} parent=47 // pred_check
        %p882 = pneg %p150
      $region50: #{_lambda_.3} parent=47 // pred_check_branch
        %884 = sbr.rel (%p882) target = $region52
      $region51: #{_lambda_.3} parent=47 // pred_region
        %p885 = scmp.lt.s32.totalorder %s17, 3
        %s886 = scalar_select %p885, %s17, 3
        %s887 = smul.addr %s886, 5
        %s888 = smul.addr %s887, 8
        %s889 = scalar_lea.vmem %s5, %s888
      $region52: #{_lambda_.3} parent=47 // pred_fallthru
        _
    $region48: #{_lambda_.3} parent=5 // pred_fallthru
      _
  $region6: #{_lambda_.3} parent=0 // loop_footer
    %s15 = sadd.s32 1, %s11
  $region7: #{_lambda_.3} parent=0 // loop_footer_branch
    %10 = sbr.rel target = $region3
  $region8: #{_lambda_.3} parent=0 // loop_exit
    _

// kernel: _lambda_.2
$region0: #{_lambda_.2}
  #allocation0 [shape = 'u32[]', space=smem, size = 0x4, offset = 0x4, fixed_abs, tag = 'smem constant byte address 0x4 - core index']
  #allocation1 [shape = 'u32[144,128]{1,0:T(1,128)}', space=vmem, size = 0x12000, scoped, tag = 'internal scratch']
  %s0 = inlined_call_operand.vmem [shape: f32[32,128], index: 0, kind: input, shape index: {}]
  %s1 = inlined_call_operand.hbm [shape: bf16[128,896], index: 1, kind: input, shape index: {}]
  %s2 = inlined_call_operand.vmem [shape: f32[1,896], index: 2, kind: input, shape index: {}]
  %s3 = inlined_call_operand.hbm [shape: bf16[256,640], index: 3, kind: input, shape index: {}]
  %s4 = inlined_call_operand.vmem [shape: f32[32,640], index: 4, kind: output, shape index: {0}]
  %s5 = inlined_call_operand.vmem [shape: f32[4,8,640], index: 5, kind: output, shape index: {1}]
  %6 = xla_tuple %s4, %s5
  %s7 = sld [smem:[#allocation0]]
  $region65: #{_lambda_.2} parent=0
    _
  %s9 = ssub.s32 1, %s7
  %s10 = scalar_select 0, %s9, %s7
  $region1: #{_lambda_.2} parent=0
    #allocation2 [shape = 'u8[229376]{0}', space=vmem, size = 0x38000, scoped, tag = 'input window, operand 1, single buffered']
    #allocation3 [shape = 's32[2]{0}', space=sflag, size = 0x8, scoped, tag = 'scoped memory for _lambda_.2']
    #allocation4 [shape = 'u8[327680]{0}', space=vmem, size = 0x50000, scoped, tag = 'input window, operand 3, single buffered']
    #allocation5 [shape = 's32[1]{0}', space=sflag, size = 0x4, scoped, tag = 'scoped memory for _lambda_.2']
    %11 = vsyncpa [#allocation3], 0
    %12 = vsyncpa [#allocation5], 0
    loop: start=0, step=1, limit=6
    $region2: #{_lambda_.2} parent=1 // loop_pre_header
      _
    $region3: #{_lambda_.2} parent=1 // loop_header
      %s14 = sphi 0, %s18
      %p15 = scmp.ge.s32.totalorder %s14, 6
      %s24 = sphi 0, %s26
      %s27 = sphi 0, %s24
      %s28 = sphi 0, %s27
      %s44 = sphi 0, %s28
      %s48 = sphi 0, %s48
      %s50 = sphi 0, %s48
      %s51 = sphi 0, %s50
      %s65 = sphi 0, %s51
      %s69 = sphi 0, %s69
      %s71 = sphi 0, %s69
      %s72 = sphi 0, %s71
      %s86 = sphi 0, %s72
      %s90 = sphi 0, %s90
      %s92 = sphi 0, %s90
      %s93 = sphi 0, %s92
      %s107 = sphi 0, %s93
      %s113 = sphi 0, %s115
      %s116 = sphi 0, %s113
      %s117 = sphi 0, %s116
      %s133 = sphi 0, %s117
      %s139 = sphi 0, %s141
      %s142 = sphi 0, %s139
      %s143 = sphi 0, %s142
      %s159 = sphi 0, %s143
    $region4: #{_lambda_.2} parent=1 // loop_header_branch
      %17 = sbr.rel (%p15) target = $region8
    $region5: #{_lambda_.2} parent=1 // loop_body
      %s19 = ssub.s32 %s14, 1
      %s20 = ssub.s32 %s14, 2
      %s21 = sadd.s32 %s14, 1
      %s22 = ssub.s32 %s14, %s21
      %p23 = scmp.eq.s32.totalorder %s22, 0
      %s25 = sadd.s32 %s24, 1
      %s26 = scalar_select %p23, %s24, %s25
      %p29 = pneg %p23
      %p30 = scmp.eq.s32.totalorder %s14, 3
      %p31 = por %p29, %p30
      %p32 = scmp.ne.s32.totalorder %s24, %s27
      %p33 = scmp.eq.s32.totalorder %s14, 0
      %p34 = por %p32, %p33
      %p35 = scmp.ne.s32.totalorder %s24, %s27
      %p36 = scmp.eq.s32.totalorder %s19, 3
      %p37 = por %p35, %p36
      %p38 = scmp.ne.s32.totalorder %s27, %s28
      %p39 = scmp.eq.s32.totalorder %s19, 0
      %p40 = por %p38, %p39
      %p41 = scmp.ne.s32.totalorder %s27, %s28
      %p42 = scmp.eq.s32.totalorder %s20, 3
      %p43 = por %p41, %p42
      %p45 = scmp.ne.s32.totalorder %s28, %s44
      %p46 = scmp.eq.s32.totalorder %s20, 0
      %p47 = por %p45, %p46
      %s49 = sadd.s32 %s48, 1
      %p52 = scmp.eq.s32.totalorder %s14, 3
      %p53 = scmp.ne.s32.totalorder %s48, %s50
      %p54 = scmp.eq.s32.totalorder %s14, 0
      %p55 = por %p53, %p54
      %p56 = scmp.ne.s32.totalorder %s48, %s50
      %p57 = scmp.eq.s32.totalorder %s19, 3
      %p58 = por %p56, %p57
      %p59 = scmp.ne.s32.totalorder %s50, %s51
      %p60 = scmp.eq.s32.totalorder %s19, 0
      %p61 = por %p59, %p60
      %p62 = scmp.ne.s32.totalorder %s50, %s51
      %p63 = scmp.eq.s32.totalorder %s20, 3
      %p64 = por %p62, %p63
      %p66 = scmp.ne.s32.totalorder %s51, %s65
      %p67 = scmp.eq.s32.totalorder %s20, 0
      %p68 = por %p66, %p67
      %s70 = sadd.s32 %s69, 1
      %p73 = scmp.eq.s32.totalorder %s14, 3
      %p74 = scmp.ne.s32.totalorder %s69, %s71
      %p75 = scmp.eq.s32.totalorder %s14, 0
      %p76 = por %p74, %p75
      %p77 = scmp.ne.s32.totalorder %s69, %s71
      %p78 = scmp.eq.s32.totalorder %s19, 3
      %p79 = por %p77, %p78
      %p80 = scmp.ne.s32.totalorder %s71, %s72
      %p81 = scmp.eq.s32.totalorder %s19, 0
      %p82 = por %p80, %p81
      %p83 = scmp.ne.s32.totalorder %s71, %s72
      %p84 = scmp.eq.s32.totalorder %s20, 3
      %p85 = por %p83, %p84
      %p87 = scmp.ne.s32.totalorder %s72, %s86
      %p88 = scmp.eq.s32.totalorder %s20, 0
      %p89 = por %p87, %p88
      %s91 = sadd.s32 %s90, 1
      %p94 = scmp.eq.s32.totalorder %s14, 3
      %p95 = scmp.ne.s32.totalorder %s90, %s92
      %p96 = scmp.eq.s32.totalorder %s14, 0
      %p97 = por %p95, %p96
      %p98 = scmp.ne.s32.totalorder %s90, %s92
      %p99 = scmp.eq.s32.totalorder %s19, 3
      %p100 = por %p98, %p99
      %p101 = scmp.ne.s32.totalorder %s92, %s93
      %p102 = scmp.eq.s32.totalorder %s19, 0
      %p103 = por %p101, %p102
      %p104 = scmp.ne.s32.totalorder %s92, %s93
      %p105 = scmp.eq.s32.totalorder %s20, 3
      %p106 = por %p104, %p105
      %p108 = scmp.ne.s32.totalorder %s93, %s107
      %p109 = scmp.eq.s32.totalorder %s20, 0
      %p110 = por %p108, %p109
      %s111 = ssub.s32 %s14, %s21
      %p112 = scmp.eq.s32.totalorder %s111, 0
      %s114 = sadd.s32 %s113, 1
      %s115 = scalar_select %p112, %s113, %s114
      %p118 = pneg %p112
      %p119 = scmp.eq.s32.totalorder %s14, 3
      %p120 = por %p118, %p119
      %p121 = scmp.ne.s32.totalorder %s113, %s116
      %p122 = scmp.eq.s32.totalorder %s14, 0
      %p123 = por %p121, %p122
      %p124 = scmp.ne.s32.totalorder %s113, %s116
      %p125 = scmp.eq.s32.totalorder %s19, 3
      %p126 = por %p124, %p125
      %p127 = scmp.ne.s32.totalorder %s116, %s117
      %p128 = scmp.eq.s32.totalorder %s19, 0
      %p129 = por %p127, %p128
      %p130 = scmp.ne.s32.totalorder %s116, %s117
      %p131 = scmp.eq.s32.totalorder %s20, 3
      %p132 = por %p130, %p131
      %p134 = scmp.ne.s32.totalorder %s117, %s133
      %p135 = scmp.eq.s32.totalorder %s20, 0
      %p136 = por %p134, %p135
      %s137 = ssub.s32 %s14, %s21
      %p138 = scmp.eq.s32.totalorder %s137, 0
      %s140 = sadd.s32 %s139, 1
      %s141 = scalar_select %p138, %s139, %s140
      %p144 = pneg %p138
      %p145 = scmp.eq.s32.totalorder %s14, 3
      %p146 = por %p144, %p145
      %p147 = scmp.ne.s32.totalorder %s139, %s142
      %p148 = scmp.eq.s32.totalorder %s14, 0
      %p149 = por %p147, %p148
      %p150 = scmp.ne.s32.totalorder %s139, %s142
      %p151 = scmp.eq.s32.totalorder %s19, 3
      %p152 = por %p150, %p151
      %p153 = scmp.ne.s32.totalorder %s142, %s143
      %p154 = scmp.eq.s32.totalorder %s19, 0
      %p155 = por %p153, %p154
      %p156 = scmp.ne.s32.totalorder %s142, %s143
      %p157 = scmp.eq.s32.totalorder %s20, 3
      %p158 = por %p156, %p157
      %p160 = scmp.ne.s32.totalorder %s143, %s159
      %p161 = scmp.eq.s32.totalorder %s20, 0
      %p162 = por %p160, %p161
      %p163 = scmp.le.s32.totalorder 1, %s14
      %p164 = scmp.lt.s32.totalorder %s14, 5
      %p165 = pnand %p163, %p164
      %p166 = pneg %p165
      // Predicated region
      $region9: #{_lambda_.2} parent=5 // pred_check
        _
      $region10: #{_lambda_.2} parent=5 // pred_check_branch
        %168 = sbr.rel (%p165) target = $region12
      $region11: #{_lambda_.2} parent=5 // pred_region
        %s169 = ssub.s32 %s14, 1
        // Predicated region
        $region13: #{_lambda_.2} parent=11 // pred_check
          %p170 = pneg %p61
        $region14: #{_lambda_.2} parent=11 // pred_check_branch
          %172 = sbr.rel (%p170) target = $region16
        $region15: #{_lambda_.2} parent=11 // pred_region
          %s174 = ssub.s32 7168, 7168
          %175 = vsyncadd [#allocation3], %s174
          %s176 = sshll.u32 [#allocation2], 4
          %s177 = int_to_ptr.vmem [resolvable:$true] %s176
          %182 = dma.hbm_to_vmem [thread:$0]  %s1, 7168, %s177, [#allocation3], 448, 448, 28
        $region16: #{_lambda_.2} parent=11 // pred_fallthru
          _
        // Predicated region
        $region17: #{_lambda_.2} parent=11 // pred_check
          %p183 = pneg %p82
        $region18: #{_lambda_.2} parent=11 // pred_check_branch
          %185 = sbr.rel (%p183) target = $region20
        $region19: #{_lambda_.2} parent=11 // pred_region
          _
        $region20: #{_lambda_.2} parent=11 // pred_fallthru
          _
        // Predicated region
        $region21: #{_lambda_.2} parent=11 // pred_check
          %p186 = pneg %p103
        $region22: #{_lambda_.2} parent=11 // pred_check_branch
          %188 = sbr.rel (%p186) target = $region24
        $region23: #{_lambda_.2} parent=11 // pred_region
          %s190 = ssub.s32 10240, 10240
          %191 = vsyncadd [#allocation5], %s190
          %s192 = sshll.u32 [#allocation4], 4
          %s193 = int_to_ptr.vmem [resolvable:$true] %s192
          %198 = dma.hbm_to_vmem [thread:$0]  %s3, 10240, %s193, [#allocation5], 320, 320, 20
        $region24: #{_lambda_.2} parent=11 // pred_fallthru
          _
      $region12: #{_lambda_.2} parent=5 // pred_fallthru
        _
      %p199 = scmp.lt.s32.totalorder %s14, 4
      // Predicated region
      $region25: #{_lambda_.2} parent=5 // pred_check
        %p200 = pneg %p199
      $region26: #{_lambda_.2} parent=5 // pred_check_branch
        %202 = sbr.rel (%p200) target = $region28
      $region27: #{_lambda_.2} parent=5 // pred_region
        // Predicated region
        $region29: #{_lambda_.2} parent=27 // pred_check
          %p203 = pneg %p34
        $region30: #{_lambda_.2} parent=27 // pred_check_branch
          %205 = sbr.rel (%p203) target = $region32
        $region31: #{_lambda_.2} parent=27 // pred_region
          %p206 = scmp.lt.s32.totalorder %s14, 3
          %s207 = scalar_select %p206, %s14, 3
          %s208 = smul.addr %s207, 8
          %s209 = scalar_lea.vmem %s0, %s208
        $region32: #{_lambda_.2} parent=27 // pred_fallthru
          _
      $region28: #{_lambda_.2} parent=5 // pred_fallthru
        _
      %p210 = scmp.le.s32.totalorder 1, %s14
      %p211 = scmp.lt.s32.totalorder %s14, 5
      %p212 = pnand %p210, %p211
      %p213 = pneg %p212
      // Predicated region
      $region33: #{_lambda_.2} parent=5 // pred_check
        _
      $region34: #{_lambda_.2} parent=5 // pred_check_branch
        %215 = sbr.rel (%p212) target = $region36
      $region35: #{_lambda_.2} parent=5 // pred_region
        %s216 = ssub.s32 %s14, 1
        // Predicated region
        $region37: #{_lambda_.2} parent=35 // pred_check
          %p217 = pneg %p61
        $region38: #{_lambda_.2} parent=35 // pred_check_branch
          %219 = sbr.rel (%p217) target = $region40
        $region39: #{_lambda_.2} parent=35 // pred_region
          %220 = dma.done [#allocation3], 7168
        $region40: #{_lambda_.2} parent=35 // pred_fallthru
          _
        // Predicated region
        $region41: #{_lambda_.2} parent=35 // pred_check
          %p221 = pneg %p103
        $region42: #{_lambda_.2} parent=35 // pred_check_branch
          %223 = sbr.rel (%p221) target = $region44
        $region43: #{_lambda_.2} parent=35 // pred_region
          %224 = dma.done [#allocation5], 10240
        $region44: #{_lambda_.2} parent=35 // pred_fallthru
          _
        %p225 = scmp.lt.s32.totalorder %s19, 3
        %s226 = scalar_select %p225, %s19, 3
        %s227 = smul.addr %s226, 8
        %s228 = scalar_lea.vmem %s0, %s227
        %p229 = pneg %p40
        %p230 = pneg %p37
        %p231 = pneg %p61
        %p232 = pneg %p58
        %p233 = pneg %p82
        %p234 = pneg %p79
        %p235 = pneg %p103
        %p236 = pneg %p100
        %p237 = pneg %p129
        %p238 = pneg %p126
        %p239 = scmp.lt.s32.totalorder %s19, 3
        %s240 = scalar_select %p239, %s19, 3
        %s241 = smul.addr %s240, 5
        %s242 = smul.addr %s241, 8
        %s243 = scalar_lea.vmem %s4, %s242
        %p244 = pneg %p155
        %p245 = pneg %p152
        %p246 = scmp.lt.s32.totalorder %s19, 3
        %s247 = scalar_select %p246, %s19, 3
        %s248 = smul.addr %s247, 5
        %s249 = smul.addr %s248, 8
        %s250 = scalar_lea.vmem %s5, %s249
        %p251 = scmp.lt.s32.totalorder %s19, 3
        %s252 = scalar_select %p251, %s19, 3
        %s253 = smul.addr %s252, 8
        %s254 = scalar_lea.vmem %s0, %s253
        %p255 = scmp.lt.s32.totalorder %s19, 3
        %s256 = scalar_select %p255, %s19, 3
        %s257 = smul.addr %s256, 5
        %s258 = smul.addr %s257, 8
        %s259 = scalar_lea.vmem %s4, %s258
        %p260 = scmp.lt.s32.totalorder %s19, 3
        %s261 = scalar_select %p260, %s19, 3
        %s262 = smul.addr %s261, 5
        %s263 = smul.addr %s262, 8
        %s264 = scalar_lea.vmem %s5, %s263
        %v266 = vld [vmem:[%s254] sm:$0xff]
        %v267 = vpack.c.bf16 %v266, %v266
        %v268 = vld [vmem:[#allocation2] sm:$0xff]
        %v269 = vld [vmem:[#allocation2 + $0x8] sm:$0xff]
        %v270 = vld [vmem:[#allocation2 + $0x10] sm:$0xff]
        %v271 = vld [vmem:[#allocation2 + $0x18] sm:$0xf]
        %v272 = vld [vmem:[#allocation2 + $0x1c] sm:$0xff]
        %v273 = vld [vmem:[#allocation2 + $0x24] sm:$0xff]
        %v274 = vld [vmem:[#allocation2 + $0x2c] sm:$0xff]
        %v275 = vld [vmem:[#allocation2 + $0x34] sm:$0xf]
        %v276 = vld [vmem:[#allocation2 + $0x38] sm:$0xff]
        %v277 = vld [vmem:[#allocation2 + $0x40] sm:$0xff]
        %v278 = vld [vmem:[#allocation2 + $0x48] sm:$0xff]
        %v279 = vld [vmem:[#allocation2 + $0x50] sm:$0xf]
        %v280 = vld [vmem:[#allocation2 + $0x54] sm:$0xff]
        %v281 = vld [vmem:[#allocation2 + $0x5c] sm:$0xff]
        %v282 = vld [vmem:[#allocation2 + $0x64] sm:$0xff]
        %v283 = vld [vmem:[#allocation2 + $0x6c] sm:$0xf]
        %v284 = vld [vmem:[#allocation2 + $0x70] sm:$0xff]
        %v285 = vld [vmem:[#allocation2 + $0x78] sm:$0xff]
        %v286 = vld [vmem:[#allocation2 + $0x80] sm:$0xff]
        %v287 = vld [vmem:[#allocation2 + $0x88] sm:$0xf]
        %v288 = vld [vmem:[#allocation2 + $0x8c] sm:$0xff]
        %v289 = vld [vmem:[#allocation2 + $0x94] sm:$0xff]
        %v290 = vld [vmem:[#allocation2 + $0x9c] sm:$0xff]
        %v291 = vld [vmem:[#allocation2 + $0xa4] sm:$0xf]
        %v292 = vld [vmem:[#allocation2 + $0xa8] sm:$0xff]
        %v293 = vld [vmem:[#allocation2 + $0xb0] sm:$0xff]
        %v294 = vld [vmem:[#allocation2 + $0xb8] sm:$0xff]
        %v295 = vld [vmem:[#allocation2 + $0xc0] sm:$0xf]
        %v296 = vld [vmem:[#allocation2 + $0xc4] sm:$0xff]
        %v297 = vld [vmem:[#allocation2 + $0xcc] sm:$0xff]
        %v298 = vld [vmem:[#allocation2 + $0xd4] sm:$0xff]
        %v299 = vld [vmem:[#allocation2 + $0xdc] sm:$0xf]
        %v300 = vld [vmem:[#allocation2 + $0xe0] sm:$0xff]
        %v301 = vld [vmem:[#allocation2 + $0xe8] sm:$0xff]
        %v302 = vld [vmem:[#allocation2 + $0xf0] sm:$0xff]
        %v303 = vld [vmem:[#allocation2 + $0xf8] sm:$0xf]
        %v304 = vld [vmem:[#allocation2 + $0xfc] sm:$0xff]
        %v305 = vld [vmem:[#allocation2 + $0x104] sm:$0xff]
        %v306 = vld [vmem:[#allocation2 + $0x10c] sm:$0xff]
        %v307 = vld [vmem:[#allocation2 + $0x114] sm:$0xf]
        %v308 = vld [vmem:[#allocation2 + $0x118] sm:$0xff]
        %v309 = vld [vmem:[#allocation2 + $0x120] sm:$0xff]
        %v310 = vld [vmem:[#allocation2 + $0x128] sm:$0xff]
        %v311 = vld [vmem:[#allocation2 + $0x130] sm:$0xf]
        %v312 = vld [vmem:[#allocation2 + $0x134] sm:$0xff]
        %v313 = vld [vmem:[#allocation2 + $0x13c] sm:$0xff]
        %v314 = vld [vmem:[#allocation2 + $0x144] sm:$0xff]
        %v315 = vld [vmem:[#allocation2 + $0x14c] sm:$0xf]
        %v316 = vld [vmem:[#allocation2 + $0x150] sm:$0xff]
        %v317 = vld [vmem:[#allocation2 + $0x158] sm:$0xff]
        %v318 = vld [vmem:[#allocation2 + $0x160] sm:$0xff]
        %v319 = vld [vmem:[#allocation2 + $0x168] sm:$0xf]
        %v320 = vld [vmem:[#allocation2 + $0x16c] sm:$0xff]
        %v321 = vld [vmem:[#allocation2 + $0x174] sm:$0xff]
        %v322 = vld [vmem:[#allocation2 + $0x17c] sm:$0xff]
        %v323 = vld [vmem:[#allocation2 + $0x184] sm:$0xf]
        %v324 = vld [vmem:[#allocation2 + $0x188] sm:$0xff]
        %v325 = vld [vmem:[#allocation2 + $0x190] sm:$0xff]
        %v326 = vld [vmem:[#allocation2 + $0x198] sm:$0xff]
        %v327 = vld [vmem:[#allocation2 + $0x1a0] sm:$0xf]
        %v328 = vld [vmem:[#allocation2 + $0x1a4] sm:$0xff]
        %v329 = vld [vmem:[#allocation2 + $0x1ac] sm:$0xff]
        %v330 = vld [vmem:[#allocation2 + $0x1b4] sm:$0xff]
        %v331 = vld [vmem:[#allocation2 + $0x1bc] sm:$0xf]
        %v332 = vld [vmem:[%s2] sm:$0xff]
        %v334 = vlaneseq
        %v335 = vshrl.u32 %v334, 7
        %v336 = vsub.s32 0, %v335
        %v337 = vrot.slane %v332, %v336
        %v338 = vlaneseq
        %v339 = vshrl.u32 %v338, 7
        %v340 = vsub.s32 1, %v339
        %v341 = vrot.slane %v332, %v340
        %v342 = vlaneseq
        %v343 = vshrl.u32 %v342, 7
        %v344 = vsub.s32 2, %v343
        %v345 = vrot.slane %v332, %v344
        %v346 = vlaneseq
        %v347 = vshrl.u32 %v346, 7
        %v348 = vsub.s32 3, %v347
        %v349 = vrot.slane %v332, %v348
        %v350 = vlaneseq
        %v351 = vshrl.u32 %v350, 7
        %v352 = vsub.s32 4, %v351
        %v353 = vrot.slane %v332, %v352
        %v354 = vlaneseq
        %v355 = vshrl.u32 %v354, 7
        %v356 = vsub.s32 5, %v355
        %v357 = vrot.slane %v332, %v356
        %v358 = vlaneseq
        %v359 = vshrl.u32 %v358, 7
        %v360 = vsub.s32 6, %v359
        %v361 = vrot.slane %v332, %v360
        %v433 = vunpack.c.l.b16 %v268
        %v434 = vunpack.c.h.b16 %v268
        %v435 = vunpack.c.l.b16 %v269
        %v436 = vunpack.c.h.b16 %v269
        %v437 = vunpack.c.l.b16 %v270
        %v438 = vunpack.c.h.b16 %v270
        %v439 = vunpack.c.l.b16 %v271
        %v440 = vunpack.c.l.b16 %v272
        %v441 = vunpack.c.h.b16 %v272
        %v442 = vunpack.c.l.b16 %v273
        %v443 = vunpack.c.h.b16 %v273
        %v444 = vunpack.c.l.b16 %v274
        %v445 = vunpack.c.h.b16 %v274
        %v446 = vunpack.c.l.b16 %v275
        %v447 = vunpack.c.l.b16 %v276
        %v448 = vunpack.c.h.b16 %v276
        %v449 = vunpack.c.l.b16 %v277
        %v450 = vunpack.c.h.b16 %v277
        %v451 = vunpack.c.l.b16 %v278
        %v452 = vunpack.c.h.b16 %v278
        %v453 = vunpack.c.l.b16 %v279
        %v454 = vunpack.c.l.b16 %v280
        %v455 = vunpack.c.h.b16 %v280
        %v456 = vunpack.c.l.b16 %v281
        %v457 = vunpack.c.h.b16 %v281
        %v458 = vunpack.c.l.b16 %v282
        %v459 = vunpack.c.h.b16 %v282
        %v460 = vunpack.c.l.b16 %v283
        %v461 = vunpack.c.l.b16 %v284
        %v462 = vunpack.c.h.b16 %v284
        %v463 = vunpack.c.l.b16 %v285
        %v464 = vunpack.c.h.b16 %v285
        %v465 = vunpack.c.l.b16 %v286
        %v466 = vunpack.c.h.b16 %v286
        %v467 = vunpack.c.l.b16 %v287
        %v468 = vunpack.c.l.b16 %v288
        %v469 = vunpack.c.h.b16 %v288
        %v470 = vunpack.c.l.b16 %v289
        %v471 = vunpack.c.h.b16 %v289
        %v472 = vunpack.c.l.b16 %v290
        %v473 = vunpack.c.h.b16 %v290
        %v474 = vunpack.c.l.b16 %v291
        %v475 = vunpack.c.l.b16 %v292
        %v476 = vunpack.c.h.b16 %v292
        %v477 = vunpack.c.l.b16 %v293
        %v478 = vunpack.c.h.b16 %v293
        %v479 = vunpack.c.l.b16 %v294
        %v480 = vunpack.c.h.b16 %v294
        %v481 = vunpack.c.l.b16 %v295
        %v482 = vunpack.c.l.b16 %v296
        %v483 = vunpack.c.h.b16 %v296
        %v484 = vunpack.c.l.b16 %v297
        %v485 = vunpack.c.h.b16 %v297
        %v486 = vunpack.c.l.b16 %v298
        %v487 = vunpack.c.h.b16 %v298
        %v488 = vunpack.c.l.b16 %v299
        %v489 = vunpack.c.l.b16 %v300
        %v490 = vunpack.c.h.b16 %v300
        %v491 = vunpack.c.l.b16 %v301
        %v492 = vunpack.c.h.b16 %v301
        %v493 = vunpack.c.l.b16 %v302
        %v494 = vunpack.c.h.b16 %v302
        %v495 = vunpack.c.l.b16 %v303
        %v496 = vunpack.c.l.b16 %v304
        %v497 = vunpack.c.h.b16 %v304
        %v498 = vunpack.c.l.b16 %v305
        %v499 = vunpack.c.h.b16 %v305
        %v500 = vunpack.c.l.b16 %v306
        %v501 = vunpack.c.h.b16 %v306
        %v502 = vunpack.c.l.b16 %v307
        %v503 = vunpack.c.l.b16 %v308
        %v504 = vunpack.c.h.b16 %v308
        %v505 = vunpack.c.l.b16 %v309
        %v506 = vunpack.c.h.b16 %v309
        %v507 = vunpack.c.l.b16 %v310
        %v508 = vunpack.c.h.b16 %v310
        %v509 = vunpack.c.l.b16 %v311
        %v510 = vunpack.c.l.b16 %v312
        %v511 = vunpack.c.h.b16 %v312
        %v512 = vunpack.c.l.b16 %v313
        %v513 = vunpack.c.h.b16 %v313
        %v514 = vunpack.c.l.b16 %v314
        %v515 = vunpack.c.h.b16 %v314
        %v516 = vunpack.c.l.b16 %v315
        %v517 = vunpack.c.l.b16 %v316
        %v518 = vunpack.c.h.b16 %v316
        %v519 = vunpack.c.l.b16 %v317
        %v520 = vunpack.c.h.b16 %v317
        %v521 = vunpack.c.l.b16 %v318
        %v522 = vunpack.c.h.b16 %v318
        %v523 = vunpack.c.l.b16 %v319
        %v524 = vunpack.c.l.b16 %v320
        %v525 = vunpack.c.h.b16 %v320
        %v526 = vunpack.c.l.b16 %v321
        %v527 = vunpack.c.h.b16 %v321
        %v528 = vunpack.c.l.b16 %v322
        %v529 = vunpack.c.h.b16 %v322
        %v530 = vunpack.c.l.b16 %v323
        %v531 = vunpack.c.l.b16 %v324
        %v532 = vunpack.c.h.b16 %v324
        %v533 = vunpack.c.l.b16 %v325
        %v534 = vunpack.c.h.b16 %v325
        %v535 = vunpack.c.l.b16 %v326
        %v536 = vunpack.c.h.b16 %v326
        %v537 = vunpack.c.l.b16 %v327
        %v538 = vunpack.c.l.b16 %v328
        %v539 = vunpack.c.h.b16 %v328
        %v540 = vunpack.c.l.b16 %v329
        %v541 = vunpack.c.h.b16 %v329
        %v542 = vunpack.c.l.b16 %v330
        %v543 = vunpack.c.h.b16 %v330
        %v544 = vunpack.c.l.b16 %v331
        %v545 = vpack.c.b16 %v440, %v433
        %v546 = vpack.c.b16 %v441, %v434
        %v547 = vpack.c.b16 %v442, %v435
        %v548 = vpack.c.b16 %v443, %v436
        %v549 = vpack.c.b16 %v444, %v437
        %v550 = vpack.c.b16 %v445, %v438
        %v551 = vpack.c.b16 %v446, %v439
        %v552 = vpack.c.b16 %v454, %v447
        %v553 = vpack.c.b16 %v455, %v448
        %v554 = vpack.c.b16 %v456, %v449
        %v555 = vpack.c.b16 %v457, %v450
        %v556 = vpack.c.b16 %v458, %v451
        %v557 = vpack.c.b16 %v459, %v452
        %v558 = vpack.c.b16 %v460, %v453
        %v559 = vpack.c.b16 %v468, %v461
        %v560 = vpack.c.b16 %v469, %v462
        %v561 = vpack.c.b16 %v470, %v463
        %v562 = vpack.c.b16 %v471, %v464
        %v563 = vpack.c.b16 %v472, %v465
        %v564 = vpack.c.b16 %v473, %v466
        %v565 = vpack.c.b16 %v474, %v467
        %v566 = vpack.c.b16 %v482, %v475
        %v567 = vpack.c.b16 %v483, %v476
        %v568 = vpack.c.b16 %v484, %v477
        %v569 = vpack.c.b16 %v485, %v478
        %v570 = vpack.c.b16 %v486, %v479
        %v571 = vpack.c.b16 %v487, %v480
        %v572 = vpack.c.b16 %v488, %v481
        %v573 = vpack.c.b16 %v496, %v489
        %v574 = vpack.c.b16 %v497, %v490
        %v575 = vpack.c.b16 %v498, %v491
        %v576 = vpack.c.b16 %v499, %v492
        %v577 = vpack.c.b16 %v500, %v493
        %v578 = vpack.c.b16 %v501, %v494
        %v579 = vpack.c.b16 %v502, %v495
        %v580 = vpack.c.b16 %v510, %v503
        %v581 = vpack.c.b16 %v511, %v504
        %v582 = vpack.c.b16 %v512, %v505
        %v583 = vpack.c.b16 %v513, %v506
        %v584 = vpack.c.b16 %v514, %v507
        %v585 = vpack.c.b16 %v515, %v508
        %v586 = vpack.c.b16 %v516, %v509
        %v587 = vpack.c.b16 %v524, %v517
        %v588 = vpack.c.b16 %v525, %v518
        %v589 = vpack.c.b16 %v526, %v519
        %v590 = vpack.c.b16 %v527, %v520
        %v591 = vpack.c.b16 %v528, %v521
        %v592 = vpack.c.b16 %v529, %v522
        %v593 = vpack.c.b16 %v530, %v523
        %v594 = vpack.c.b16 %v538, %v531
        %v595 = vpack.c.b16 %v539, %v532
        %v596 = vpack.c.b16 %v540, %v533
        %v597 = vpack.c.b16 %v541, %v534
        %v598 = vpack.c.b16 %v542, %v535
        %v599 = vpack.c.b16 %v543, %v536
        %v600 = vpack.c.b16 %v544, %v537
        %657 = vmatprep.subr.bf16.mxu0 %v595
        %658 = vmatpush1.bf16.msra.mxu0 %v594
        %659 = vmatprep.subr.bf16.mxu0 %v588
        %660 = vmatpush1.bf16.msra.mxu0 %v587
        %661 = vmatprep.subr.bf16.mxu0 %v581
        %662 = vmatpush1.bf16.msra.mxu0 %v580
        %663 = vmatprep.subr.bf16.mxu0 %v574
        %664 = vmatpush1.bf16.msra.mxu0 %v573
        %665 = vmatprep.subr.bf16.mxu0 %v567
        %666 = vmatpush1.bf16.msra.mxu0 %v566
        %667 = vmatprep.subr.bf16.mxu0 %v560
        %668 = vmatpush1.bf16.msra.mxu0 %v559
        %669 = vmatprep.subr.bf16.mxu0 %v553
        %670 = vmatpush1.bf16.msra.mxu0 %v552
        %671 = vmatprep.subr.bf16.mxu0 %v546
        %672 = vmatpush1.bf16.msra.mxu0 %v545
        %673 = vmatprep.subr.bf16.mxu0 0
        %674 = vmatpush2.bf16.msra.mxu0 0
        %675 = vmatprep.subr.bf16.mxu0 0
        %676 = vmatpush2.bf16.msra.mxu0 0
        %677 = vmatprep.subr.bf16.mxu0 0
        %678 = vmatpush2.bf16.msra.mxu0 0
        %679 = vmatprep.subr.bf16.mxu0 0
        %680 = vmatpush2.bf16.msra.mxu0 0
        %681 = vmatprep.subr.bf16.mxu0 0
        %682 = vmatpush2.bf16.msra.mxu0 0
        %683 = vmatprep.subr.bf16.mxu0 0
        %684 = vmatpush2.bf16.msra.mxu0 0
        %685 = vmatprep.subr.bf16.mxu0 0
        %686 = vmatpush2.bf16.msra.mxu0 0
        %687 = vmatprep.subr.bf16.mxu0 0
        %688 = vmatpush2.bf16.msra.mxu0 0
        %689 = vmatprep.mubr.bf16.mxu0 0
        %690 = vmatmul.mubr.bf16.gmra.mxu0 %v267
        %v691 = vpop.f32.mrf.mxu0
        %v692 = vadd.f32 %v337, %v691
        %v693 = vpop.f32.mrf.mxu0
        %v694 = vadd.f32 %v341, %v693
        %v695 = vpop.f32.mrf.mxu0
        %v696 = vpop.f32.mrf.mxu0
        %697 = vdwg.mxu0
        %698 = vmatprep.subr.bf16.mxu0 %v597
        %699 = vmatpush1.bf16.msra.mxu0 %v596
        %700 = vmatprep.subr.bf16.mxu0 %v590
        %701 = vmatpush1.bf16.msra.mxu0 %v589
        %702 = vmatprep.subr.bf16.mxu0 %v583
        %703 = vmatpush1.bf16.msra.mxu0 %v582
        %704 = vmatprep.subr.bf16.mxu0 %v576
        %705 = vmatpush1.bf16.msra.mxu0 %v575
        %706 = vmatprep.subr.bf16.mxu0 %v569
        %707 = vmatpush1.bf16.msra.mxu0 %v568
        %708 = vmatprep.subr.bf16.mxu0 %v562
        %709 = vmatpush1.bf16.msra.mxu0 %v561
        %710 = vmatprep.subr.bf16.mxu0 %v555
        %711 = vmatpush1.bf16.msra.mxu0 %v554
        %712 = vmatprep.subr.bf16.mxu0 %v548
        %713 = vmatpush1.bf16.msra.mxu0 %v547
        %714 = vmatprep.subr.bf16.mxu0 0
        %715 = vmatpush2.bf16.msra.mxu0 0
        %716 = vmatprep.subr.bf16.mxu0 0
        %717 = vmatpush2.bf16.msra.mxu0 0
        %718 = vmatprep.subr.bf16.mxu0 0
        %719 = vmatpush2.bf16.msra.mxu0 0
        %720 = vmatprep.subr.bf16.mxu0 0
        %721 = vmatpush2.bf16.msra.mxu0 0
        %722 = vmatprep.subr.bf16.mxu0 0
        %723 = vmatpush2.bf16.msra.mxu0 0
        %724 = vmatprep.subr.bf16.mxu0 0
        %725 = vmatpush2.bf16.msra.mxu0 0
        %726 = vmatprep.subr.bf16.mxu0 0
        %727 = vmatpush2.bf16.msra.mxu0 0
        %728 = vmatprep.subr.bf16.mxu0 0
        %729 = vmatpush2.bf16.msra.mxu0 0
        %730 = vmatprep.mubr.bf16.mxu0 0
        %731 = vmatmul.mubr.bf16.gmra.mxu0 %v267
        %v732 = vpop.f32.mrf.mxu0
        %v733 = vadd.f32 %v345, %v732
        %v734 = vpop.f32.mrf.mxu0
        %v735 = vadd.f32 %v349, %v734
        %v736 = vpop.f32.mrf.mxu0
        %v737 = vpop.f32.mrf.mxu0
        %738 = vdwg.mxu0
        %739 = vmatprep.subr.bf16.mxu0 %v599
        %740 = vmatpush1.bf16.msra.mxu0 %v598
        %741 = vmatprep.subr.bf16.mxu0 %v592
        %742 = vmatpush1.bf16.msra.mxu0 %v591
        %743 = vmatprep.subr.bf16.mxu0 %v585
        %744 = vmatpush1.bf16.msra.mxu0 %v584
        %745 = vmatprep.subr.bf16.mxu0 %v578
        %746 = vmatpush1.bf16.msra.mxu0 %v577
        %747 = vmatprep.subr.bf16.mxu0 %v571
        %748 = vmatpush1.bf16.msra.mxu0 %v570
        %749 = vmatprep.subr.bf16.mxu0 %v564
        %750 = vmatpush1.bf16.msra.mxu0 %v563
        %751 = vmatprep.subr.bf16.mxu0 %v557
        %752 = vmatpush1.bf16.msra.mxu0 %v556
        %753 = vmatprep.subr.bf16.mxu0 %v550
        %754 = vmatpush1.bf16.msra.mxu0 %v549
        %755 = vmatprep.subr.bf16.mxu0 0
        %756 = vmatpush2.bf16.msra.mxu0 0
        %757 = vmatprep.subr.bf16.mxu0 0
        %758 = vmatpush2.bf16.msra.mxu0 0
        %759 = vmatprep.subr.bf16.mxu0 0
        %760 = vmatpush2.bf16.msra.mxu0 0
        %761 = vmatprep.subr.bf16.mxu0 0
        %762 = vmatpush2.bf16.msra.mxu0 0
        %763 = vmatprep.subr.bf16.mxu0 0
        %764 = vmatpush2.bf16.msra.mxu0 0
        %765 = vmatprep.subr.bf16.mxu0 0
        %766 = vmatpush2.bf16.msra.mxu0 0
        %767 = vmatprep.subr.bf16.mxu0 0
        %768 = vmatpush2.bf16.msra.mxu0 0
        %769 = vmatprep.subr.bf16.mxu0 0
        %770 = vmatpush2.bf16.msra.mxu0 0
        %771 = vmatprep.mubr.bf16.mxu0 0
        %772 = vmatmul.mubr.bf16.gmra.mxu0 %v267
        %v773 = vpop.f32.mrf.mxu0
        %v774 = vadd.f32 %v353, %v773
        %v775 = vpop.f32.mrf.mxu0
        %v776 = vadd.f32 %v357, %v775
        %v777 = vpop.f32.mrf.mxu0
        %v778 = vpop.f32.mrf.mxu0
        %779 = vdwg.mxu0
        %780 = vmatprep.subr.bf16.mxu0 0
        %781 = vmatpush1.bf16.msra.mxu0 %v600
        %782 = vmatprep.subr.bf16.mxu0 0
        %783 = vmatpush1.bf16.msra.mxu0 %v593
        %784 = vmatprep.subr.bf16.mxu0 0
        %785 = vmatpush1.bf16.msra.mxu0 %v586
        %786 = vmatprep.subr.bf16.mxu0 0
        %787 = vmatpush1.bf16.msra.mxu0 %v579
        %788 = vmatprep.subr.bf16.mxu0 0
        %789 = vmatpush1.bf16.msra.mxu0 %v572
        %790 = vmatprep.subr.bf16.mxu0 0
        %791 = vmatpush1.bf16.msra.mxu0 %v565
        %792 = vmatprep.subr.bf16.mxu0 0
        %793 = vmatpush1.bf16.msra.mxu0 %v558
        %794 = vmatprep.subr.bf16.mxu0 0
        %795 = vmatpush1.bf16.msra.mxu0 %v551
        %796 = vmatprep.subr.bf16.mxu0 0
        %797 = vmatpush2.bf16.msra.mxu0 0
        %798 = vmatprep.subr.bf16.mxu0 0
        %799 = vmatpush2.bf16.msra.mxu0 0
        %800 = vmatprep.subr.bf16.mxu0 0
        %801 = vmatpush2.bf16.msra.mxu0 0
        %802 = vmatprep.subr.bf16.mxu0 0
        %803 = vmatpush2.bf16.msra.mxu0 0
        %804 = vmatprep.subr.bf16.mxu0 0
        %805 = vmatpush2.bf16.msra.mxu0 0
        %806 = vmatprep.subr.bf16.mxu0 0
        %807 = vmatpush2.bf16.msra.mxu0 0
        %808 = vmatprep.subr.bf16.mxu0 0
        %809 = vmatpush2.bf16.msra.mxu0 0
        %810 = vmatprep.subr.bf16.mxu0 0
        %811 = vmatpush2.bf16.msra.mxu0 0
        %812 = vmatprep.mubr.bf16.mxu0 0
        %813 = vmatmul.mubr.bf16.gmra.mxu0 %v267
        %v814 = vpop.f32.mrf.mxu0
        %v815 = vadd.f32 %v361, %v814
        %v816 = vpop.f32.mrf.mxu0
        %v817 = vpop.f32.mrf.mxu0
        %v818 = vpop.f32.mrf.mxu0
        %819 = vdwg.mxu0
        %vm820 = vcmp.gt.f32.partialorder %v692, 0.0
        %vm821 = vcmp.gt.f32.partialorder %v694, 0.0
        %v822 = vmul.f32 %v692, 0.01
        %v823 = vmul.f32 %v694, 0.01
        %v824 = vsel %vm820, %v692, %v822
        %v825 = vsel %vm821, %v694, %v823
        %v826 = vpack.c.bf16 %v824, %v824
        %v827 = vpack.c.bf16 %v825, %v825
        %v828 = vld [vmem:[#allocation4] sm:$0xff]
        %v829 = vld [vmem:[#allocation4 + $0x8] sm:$0xff]
        %v830 = vld [vmem:[#allocation4 + $0x10] sm:$0xf]
        %v831 = vld [vmem:[#allocation4 + $0x14] sm:$0xff]
        %v832 = vld [vmem:[#allocation4 + $0x1c] sm:$0xff]
        %v833 = vld [vmem:[#allocation4 + $0x24] sm:$0xf]
        %v834 = vld [vmem:[#allocation4 + $0x28] sm:$0xff]
        %v835 = vld [vmem:[#allocation4 + $0x30] sm:$0xff]
        %v836 = vld [vmem:[#allocation4 + $0x38] sm:$0xf]
        %v837 = vld [vmem:[#allocation4 + $0x3c] sm:$0xff]
        %v838 = vld [vmem:[#allocation4 + $0x44] sm:$0xff]
        %v839 = vld [vmem:[#allocation4 + $0x4c] sm:$0xf]
        %v840 = vld [vmem:[#allocation4 + $0x50] sm:$0xff]
        %v841 = vld [vmem:[#allocation4 + $0x58] sm:$0xff]
        %v842 = vld [vmem:[#allocation4 + $0x60] sm:$0xf]
        %v843 = vld [vmem:[#allocation4 + $0x64] sm:$0xff]
        %v844 = vld [vmem:[#allocation4 + $0x6c] sm:$0xff]
        %v845 = vld [vmem:[#allocation4 + $0x74] sm:$0xf]
        %v846 = vld [vmem:[#allocation4 + $0x78] sm:$0xff]
        %v847 = vld [vmem:[#allocation4 + $0x80] sm:$0xff]
        %v848 = vld [vmem:[#allocation4 + $0x88] sm:$0xf]
        %v849 = vld [vmem:[#allocation4 + $0x8c] sm:$0xff]
        %v850 = vld [vmem:[#allocation4 + $0x94] sm:$0xff]
        %v851 = vld [vmem:[#allocation4 + $0x9c] sm:$0xf]
        %v852 = vld [vmem:[#allocation4 + $0xa0] sm:$0xff]
        %v853 = vld [vmem:[#allocation4 + $0xa8] sm:$0xff]
        %v854 = vld [vmem:[#allocation4 + $0xb0] sm:$0xf]
        %v855 = vld [vmem:[#allocation4 + $0xb4] sm:$0xff]
        %v856 = vld [vmem:[#allocation4 + $0xbc] sm:$0xff]
        %v857 = vld [vmem:[#allocation4 + $0xc4] sm:$0xf]
        %v858 = vld [vmem:[#allocation4 + $0xc8] sm:$0xff]
        %v859 = vld [vmem:[#allocation4 + $0xd0] sm:$0xff]
        %v860 = vld [vmem:[#allocation4 + $0xd8] sm:$0xf]
        %v861 = vld [vmem:[#allocation4 + $0xdc] sm:$0xff]
        %v862 = vld [vmem:[#allocation4 + $0xe4] sm:$0xff]
        %v863 = vld [vmem:[#allocation4 + $0xec] sm:$0xf]
        %v864 = vld [vmem:[#allocation4 + $0xf0] sm:$0xff]
        %v865 = vld [vmem:[#allocation4 + $0xf8] sm:$0xff]
        %v866 = vld [vmem:[#allocation4 + $0x100] sm:$0xf]
        %v867 = vld [vmem:[#allocation4 + $0x104] sm:$0xff]
        %v868 = vld [vmem:[#allocation4 + $0x10c] sm:$0xff]
        %v869 = vld [vmem:[#allocation4 + $0x114] sm:$0xf]
        %v870 = vld [vmem:[#allocation4 + $0x118] sm:$0xff]
        %v871 = vld [vmem:[#allocation4 + $0x120] sm:$0xff]
        %v872 = vld [vmem:[#allocation4 + $0x128] sm:$0xf]
        %v873 = vld [vmem:[#allocation4 + $0x12c] sm:$0xff]
        %v874 = vld [vmem:[#allocation4 + $0x134] sm:$0xff]
        %v875 = vld [vmem:[#allocation4 + $0x13c] sm:$0xf]
        %v876 = vld [vmem:[#allocation4 + $0x140] sm:$0xff]
        %v877 = vld [vmem:[#allocation4 + $0x148] sm:$0xff]
        %v878 = vld [vmem:[#allocation4 + $0x150] sm:$0xf]
        %v879 = vld [vmem:[#allocation4 + $0x154] sm:$0xff]
        %v880 = vld [vmem:[#allocation4 + $0x15c] sm:$0xff]
        %v881 = vld [vmem:[#allocation4 + $0x164] sm:$0xf]
        %v882 = vld [vmem:[#allocation4 + $0x168] sm:$0xff]
        %v883 = vld [vmem:[#allocation4 + $0x170] sm:$0xff]
        %v884 = vld [vmem:[#allocation4 + $0x178] sm:$0xf]
        %v885 = vld [vmem:[#allocation4 + $0x17c] sm:$0xff]
        %v886 = vld [vmem:[#allocation4 + $0x184] sm:$0xff]
        %v887 = vld [vmem:[#allocation4 + $0x18c] sm:$0xf]
        %v888 = vld [vmem:[#allocation4 + $0x190] sm:$0xff]
        %v889 = vld [vmem:[#allocation4 + $0x198] sm:$0xff]
        %v890 = vld [vmem:[#allocation4 + $0x1a0] sm:$0xf]
        %v891 = vld [vmem:[#allocation4 + $0x1a4] sm:$0xff]
        %v892 = vld [vmem:[#allocation4 + $0x1ac] sm:$0xff]
        %v893 = vld [vmem:[#allocation4 + $0x1b4] sm:$0xf]
        %v894 = vld [vmem:[#allocation4 + $0x1b8] sm:$0xff]
        %v895 = vld [vmem:[#allocation4 + $0x1c0] sm:$0xff]
        %v896 = vld [vmem:[#allocation4 + $0x1c8] sm:$0xf]
        %v897 = vld [vmem:[#allocation4 + $0x1cc] sm:$0xff]
        %v898 = vld [vmem:[#allocation4 + $0x1d4] sm:$0xff]
        %v899 = vld [vmem:[#allocation4 + $0x1dc] sm:$0xf]
        %v900 = vld [vmem:[#allocation4 + $0x1e0] sm:$0xff]
        %v901 = vld [vmem:[#allocation4 + $0x1e8] sm:$0xff]
        %v902 = vld [vmem:[#allocation4 + $0x1f0] sm:$0xf]
        %v903 = vld [vmem:[#allocation4 + $0x1f4] sm:$0xff]
        %v904 = vld [vmem:[#allocation4 + $0x1fc] sm:$0xff]
        %v905 = vld [vmem:[#allocation4 + $0x204] sm:$0xf]
        %v906 = vld [vmem:[#allocation4 + $0x208] sm:$0xff]
        %v907 = vld [vmem:[#allocation4 + $0x210] sm:$0xff]
        %v908 = vld [vmem:[#allocation4 + $0x218] sm:$0xf]
        %v909 = vld [vmem:[#allocation4 + $0x21c] sm:$0xff]
        %v910 = vld [vmem:[#allocation4 + $0x224] sm:$0xff]
        %v911 = vld [vmem:[#allocation4 + $0x22c] sm:$0xf]
        %v912 = vld [vmem:[#allocation4 + $0x230] sm:$0xff]
        %v913 = vld [vmem:[#allocation4 + $0x238] sm:$0xff]
        %v914 = vld [vmem:[#allocation4 + $0x240] sm:$0xf]
        %v915 = vld [vmem:[#allocation4 + $0x244] sm:$0xff]
        %v916 = vld [vmem:[#allocation4 + $0x24c] sm:$0xff]
        %v917 = vld [vmem:[#allocation4 + $0x254] sm:$0xf]
        %v918 = vld [vmem:[#allocation4 + $0x258] sm:$0xff]
        %v919 = vld [vmem:[#allocation4 + $0x260] sm:$0xff]
        %v920 = vld [vmem:[#allocation4 + $0x268] sm:$0xf]
        %v921 = vld [vmem:[#allocation4 + $0x26c] sm:$0xff]
        %v922 = vld [vmem:[#allocation4 + $0x274] sm:$0xff]
        %v923 = vld [vmem:[#allocation4 + $0x27c] sm:$0xf]
        %v1020 = vunpack.c.l.b16 %v828
        %v1021 = vunpack.c.h.b16 %v828
        %v1022 = vunpack.c.l.b16 %v829
        %v1023 = vunpack.c.h.b16 %v829
        %v1024 = vunpack.c.l.b16 %v830
        %v1025 = vunpack.c.l.b16 %v831
        %v1026 = vunpack.c.h.b16 %v831
        %v1027 = vunpack.c.l.b16 %v832
        %v1028 = vunpack.c.h.b16 %v832
        %v1029 = vunpack.c.l.b16 %v833
        %v1030 = vunpack.c.l.b16 %v834
        %v1031 = vunpack.c.h.b16 %v834
        %v1032 = vunpack.c.l.b16 %v835
        %v1033 = vunpack.c.h.b16 %v835
        %v1034 = vunpack.c.l.b16 %v836
        %v1035 = vunpack.c.l.b16 %v837
        %v1036 = vunpack.c.h.b16 %v837
        %v1037 = vunpack.c.l.b16 %v838
        %v1038 = vunpack.c.h.b16 %v838
        %v1039 = vunpack.c.l.b16 %v839
        %v1040 = vunpack.c.l.b16 %v840
        %v1041 = vunpack.c.h.b16 %v840
        %v1042 = vunpack.c.l.b16 %v841
        %v1043 = vunpack.c.h.b16 %v841
        %v1044 = vunpack.c.l.b16 %v842
        %v1045 = vunpack.c.l.b16 %v843
        %v1046 = vunpack.c.h.b16 %v843
        %v1047 = vunpack.c.l.b16 %v844
        %v1048 = vunpack.c.h.b16 %v844
        %v1049 = vunpack.c.l.b16 %v845
        %v1050 = vunpack.c.l.b16 %v846
        %v1051 = vunpack.c.h.b16 %v846
        %v1052 = vunpack.c.l.b16 %v847
        %v1053 = vunpack.c.h.b16 %v847
        %v1054 = vunpack.c.l.b16 %v848
        %v1055 = vunpack.c.l.b16 %v849
        %v1056 = vunpack.c.h.b16 %v849
        %v1057 = vunpack.c.l.b16 %v850
        %v1058 = vunpack.c.h.b16 %v850
        %v1059 = vunpack.c.l.b16 %v851
        %v1060 = vunpack.c.l.b16 %v852
        %v1061 = vunpack.c.h.b16 %v852
        %v1062 = vunpack.c.l.b16 %v853
        %v1063 = vunpack.c.h.b16 %v853
        %v1064 = vunpack.c.l.b16 %v854
        %v1065 = vunpack.c.l.b16 %v855
        %v1066 = vunpack.c.h.b16 %v855
        %v1067 = vunpack.c.l.b16 %v856
        %v1068 = vunpack.c.h.b16 %v856
        %v1069 = vunpack.c.l.b16 %v857
        %v1070 = vunpack.c.l.b16 %v858
        %v1071 = vunpack.c.h.b16 %v858
        %v1072 = vunpack.c.l.b16 %v859
        %v1073 = vunpack.c.h.b16 %v859
        %v1074 = vunpack.c.l.b16 %v860
        %v1075 = vunpack.c.l.b16 %v861
        %v1076 = vunpack.c.h.b16 %v861
        %v1077 = vunpack.c.l.b16 %v862
        %v1078 = vunpack.c.h.b16 %v862
        %v1079 = vunpack.c.l.b16 %v863
        %v1080 = vunpack.c.l.b16 %v864
        %v1081 = vunpack.c.h.b16 %v864
        %v1082 = vunpack.c.l.b16 %v865
        %v1083 = vunpack.c.h.b16 %v865
        %v1084 = vunpack.c.l.b16 %v866
        %v1085 = vunpack.c.l.b16 %v867
        %v1086 = vunpack.c.h.b16 %v867
        %v1087 = vunpack.c.l.b16 %v868
        %v1088 = vunpack.c.h.b16 %v868
        %v1089 = vunpack.c.l.b16 %v869
        %v1090 = vunpack.c.l.b16 %v870
        %v1091 = vunpack.c.h.b16 %v870
        %v1092 = vunpack.c.l.b16 %v871
        %v1093 = vunpack.c.h.b16 %v871
        %v1094 = vunpack.c.l.b16 %v872
        %v1095 = vunpack.c.l.b16 %v873
        %v1096 = vunpack.c.h.b16 %v873
        %v1097 = vunpack.c.l.b16 %v874
        %v1098 = vunpack.c.h.b16 %v874
        %v1099 = vunpack.c.l.b16 %v875
        %v1100 = vunpack.c.l.b16 %v876
        %v1101 = vunpack.c.h.b16 %v876
        %v1102 = vunpack.c.l.b16 %v877
        %v1103 = vunpack.c.h.b16 %v877
        %v1104 = vunpack.c.l.b16 %v878
        %v1105 = vunpack.c.l.b16 %v879
        %v1106 = vunpack.c.h.b16 %v879
        %v1107 = vunpack.c.l.b16 %v880
        %v1108 = vunpack.c.h.b16 %v880
        %v1109 = vunpack.c.l.b16 %v881
        %v1110 = vunpack.c.l.b16 %v882
        %v1111 = vunpack.c.h.b16 %v882
        %v1112 = vunpack.c.l.b16 %v883
        %v1113 = vunpack.c.h.b16 %v883
        %v1114 = vunpack.c.l.b16 %v884
        %v1115 = vunpack.c.l.b16 %v885
        %v1116 = vunpack.c.h.b16 %v885
        %v1117 = vunpack.c.l.b16 %v886
        %v1118 = vunpack.c.h.b16 %v886
        %v1119 = vunpack.c.l.b16 %v887
        %v1120 = vunpack.c.l.b16 %v888
        %v1121 = vunpack.c.h.b16 %v888
        %v1122 = vunpack.c.l.b16 %v889
        %v1123 = vunpack.c.h.b16 %v889
        %v1124 = vunpack.c.l.b16 %v890
        %v1125 = vunpack.c.l.b16 %v891
        %v1126 = vunpack.c.h.b16 %v891
        %v1127 = vunpack.c.l.b16 %v892
        %v1128 = vunpack.c.h.b16 %v892
        %v1129 = vunpack.c.l.b16 %v893
        %v1130 = vunpack.c.l.b16 %v894
        %v1131 = vunpack.c.h.b16 %v894
        %v1132 = vunpack.c.l.b16 %v895
        %v1133 = vunpack.c.h.b16 %v895
        %v1134 = vunpack.c.l.b16 %v896
        %v1135 = vunpack.c.l.b16 %v897
        %v1136 = vunpack.c.h.b16 %v897
        %v1137 = vunpack.c.l.b16 %v898
        %v1138 = vunpack.c.h.b16 %v898
        %v1139 = vunpack.c.l.b16 %v899
        %v1140 = vunpack.c.l.b16 %v900
        %v1141 = vunpack.c.h.b16 %v900
        %v1142 = vunpack.c.l.b16 %v901
        %v1143 = vunpack.c.h.b16 %v901
        %v1144 = vunpack.c.l.b16 %v902
        %v1145 = vunpack.c.l.b16 %v903
        %v1146 = vunpack.c.h.b16 %v903
        %v1147 = vunpack.c.l.b16 %v904
        %v1148 = vunpack.c.h.b16 %v904
        %v1149 = vunpack.c.l.b16 %v905
        %v1150 = vunpack.c.l.b16 %v906
        %v1151 = vunpack.c.h.b16 %v906
        %v1152 = vunpack.c.l.b16 %v907
        %v1153 = vunpack.c.h.b16 %v907
        %v1154 = vunpack.c.l.b16 %v908
        %v1155 = vunpack.c.l.b16 %v909
        %v1156 = vunpack.c.h.b16 %v909
        %v1157 = vunpack.c.l.b16 %v910
        %v1158 = vunpack.c.h.b16 %v910
        %v1159 = vunpack.c.l.b16 %v911
        %v1160 = vunpack.c.l.b16 %v912
        %v1161 = vunpack.c.h.b16 %v912
        %v1162 = vunpack.c.l.b16 %v913
        %v1163 = vunpack.c.h.b16 %v913
        %v1164 = vunpack.c.l.b16 %v914
        %v1165 = vunpack.c.l.b16 %v915
        %v1166 = vunpack.c.h.b16 %v915
        %v1167 = vunpack.c.l.b16 %v916
        %v1168 = vunpack.c.h.b16 %v916
        %v1169 = vunpack.c.l.b16 %v917
        %v1170 = vunpack.c.l.b16 %v918
        %v1171 = vunpack.c.h.b16 %v918
        %v1172 = vunpack.c.l.b16 %v919
        %v1173 = vunpack.c.h.b16 %v919
        %v1174 = vunpack.c.l.b16 %v920
        %v1175 = vunpack.c.l.b16 %v921
        %v1176 = vunpack.c.h.b16 %v921
        %v1177 = vunpack.c.l.b16 %v922
        %v1178 = vunpack.c.h.b16 %v922
        %v1179 = vunpack.c.l.b16 %v923
        %v1180 = vpack.c.b16 %v1025, %v1020
        %v1181 = vpack.c.b16 %v1026, %v1021
        %v1182 = vpack.c.b16 %v1027, %v1022
        %v1183 = vpack.c.b16 %v1028, %v1023
        %v1184 = vpack.c.b16 %v1029, %v1024
        %v1185 = vpack.c.b16 %v1035, %v1030
        %v1186 = vpack.c.b16 %v1036, %v1031
        %v1187 = vpack.c.b16 %v1037, %v1032
        %v1188 = vpack.c.b16 %v1038, %v1033
        %v1189 = vpack.c.b16 %v1039, %v1034
        %v1190 = vpack.c.b16 %v1045, %v1040
        %v1191 = vpack.c.b16 %v1046, %v1041
        %v1192 = vpack.c.b16 %v1047, %v1042
        %v1193 = vpack.c.b16 %v1048, %v1043
        %v1194 = vpack.c.b16 %v1049, %v1044
        %v1195 = vpack.c.b16 %v1055, %v1050
        %v1196 = vpack.c.b16 %v1056, %v1051
        %v1197 = vpack.c.b16 %v1057, %v1052
        %v1198 = vpack.c.b16 %v1058, %v1053
        %v1199 = vpack.c.b16 %v1059, %v1054
        %v1200 = vpack.c.b16 %v1065, %v1060
        %v1201 = vpack.c.b16 %v1066, %v1061
        %v1202 = vpack.c.b16 %v1067, %v1062
        %v1203 = vpack.c.b16 %v1068, %v1063
        %v1204 = vpack.c.b16 %v1069, %v1064
        %v1205 = vpack.c.b16 %v1075, %v1070
        %v1206 = vpack.c.b16 %v1076, %v1071
        %v1207 = vpack.c.b16 %v1077, %v1072
        %v1208 = vpack.c.b16 %v1078, %v1073
        %v1209 = vpack.c.b16 %v1079, %v1074
        %v1210 = vpack.c.b16 %v1085, %v1080
        %v1211 = vpack.c.b16 %v1086, %v1081
        %v1212 = vpack.c.b16 %v1087, %v1082
        %v1213 = vpack.c.b16 %v1088, %v1083
        %v1214 = vpack.c.b16 %v1089, %v1084
        %v1215 = vpack.c.b16 %v1095, %v1090
        %v1216 = vpack.c.b16 %v1096, %v1091
        %v1217 = vpack.c.b16 %v1097, %v1092
        %v1218 = vpack.c.b16 %v1098, %v1093
        %v1219 = vpack.c.b16 %v1099, %v1094
        %v1220 = vpack.c.b16 %v1105, %v1100
        %v1221 = vpack.c.b16 %v1106, %v1101
        %v1222 = vpack.c.b16 %v1107, %v1102
        %v1223 = vpack.c.b16 %v1108, %v1103
        %v1224 = vpack.c.b16 %v1109, %v1104
        %v1225 = vpack.c.b16 %v1115, %v1110
        %v1226 = vpack.c.b16 %v1116, %v1111
        %v1227 = vpack.c.b16 %v1117, %v1112
        %v1228 = vpack.c.b16 %v1118, %v1113
        %v1229 = vpack.c.b16 %v1119, %v1114
        %v1230 = vpack.c.b16 %v1125, %v1120
        %v1231 = vpack.c.b16 %v1126, %v1121
        %v1232 = vpack.c.b16 %v1127, %v1122
        %v1233 = vpack.c.b16 %v1128, %v1123
        %v1234 = vpack.c.b16 %v1129, %v1124
        %v1235 = vpack.c.b16 %v1135, %v1130
        %v1236 = vpack.c.b16 %v1136, %v1131
        %v1237 = vpack.c.b16 %v1137, %v1132
        %v1238 = vpack.c.b16 %v1138, %v1133
        %v1239 = vpack.c.b16 %v1139, %v1134
        %v1240 = vpack.c.b16 %v1145, %v1140
        %v1241 = vpack.c.b16 %v1146, %v1141
        %v1242 = vpack.c.b16 %v1147, %v1142
        %v1243 = vpack.c.b16 %v1148, %v1143
        %v1244 = vpack.c.b16 %v1149, %v1144
        %v1245 = vpack.c.b16 %v1155, %v1150
        %v1246 = vpack.c.b16 %v1156, %v1151
        %v1247 = vpack.c.b16 %v1157, %v1152
        %v1248 = vpack.c.b16 %v1158, %v1153
        %v1249 = vpack.c.b16 %v1159, %v1154
        %v1250 = vpack.c.b16 %v1165, %v1160
        %v1251 = vpack.c.b16 %v1166, %v1161
        %v1252 = vpack.c.b16 %v1167, %v1162
        %v1253 = vpack.c.b16 %v1168, %v1163
        %v1254 = vpack.c.b16 %v1169, %v1164
        %v1255 = vpack.c.b16 %v1175, %v1170
        %v1256 = vpack.c.b16 %v1176, %v1171
        %v1257 = vpack.c.b16 %v1177, %v1172
        %v1258 = vpack.c.b16 %v1178, %v1173
        %v1259 = vpack.c.b16 %v1179, %v1174
        %1340 = vmatprep.subr.bf16.mxu0 %v1216
        %1341 = vmatpush1.bf16.msra.mxu0 %v1215
        %1342 = vmatprep.subr.bf16.mxu0 %v1211
        %1343 = vmatpush1.bf16.msra.mxu0 %v1210
        %1344 = vmatprep.subr.bf16.mxu0 %v1206
        %1345 = vmatpush1.bf16.msra.mxu0 %v1205
        %1346 = vmatprep.subr.bf16.mxu0 %v1201
        %1347 = vmatpush1.bf16.msra.mxu0 %v1200
        %1348 = vmatprep.subr.bf16.mxu0 %v1196
        %1349 = vmatpush1.bf16.msra.mxu0 %v1195
        %1350 = vmatprep.subr.bf16.mxu0 %v1191
        %1351 = vmatpush1.bf16.msra.mxu0 %v1190
        %1352 = vmatprep.subr.bf16.mxu0 %v1186
        %1353 = vmatpush1.bf16.msra.mxu0 %v1185
        %1354 = vmatprep.subr.bf16.mxu0 %v1181
        %1355 = vmatpush1.bf16.msra.mxu0 %v1180
        %1356 = vmatprep.subr.bf16.mxu0 %v1256
        %1357 = vmatpush2.bf16.msra.mxu0 %v1255
        %1358 = vmatprep.subr.bf16.mxu0 %v1251
        %1359 = vmatpush2.bf16.msra.mxu0 %v1250
        %1360 = vmatprep.subr.bf16.mxu0 %v1246
        %1361 = vmatpush2.bf16.msra.mxu0 %v1245
        %1362 = vmatprep.subr.bf16.mxu0 %v1241
        %1363 = vmatpush2.bf16.msra.mxu0 %v1240
        %1364 = vmatprep.subr.bf16.mxu0 %v1236
        %1365 = vmatpush2.bf16.msra.mxu0 %v1235
        %1366 = vmatprep.subr.bf16.mxu0 %v1231
        %1367 = vmatpush2.bf16.msra.mxu0 %v1230
        %1368 = vmatprep.subr.bf16.mxu0 %v1226
        %1369 = vmatpush2.bf16.msra.mxu0 %v1225
        %1370 = vmatprep.subr.bf16.mxu0 %v1221
        %1371 = vmatpush2.bf16.msra.mxu0 %v1220
        %1372 = vmatprep.mubr.bf16.mxu0 %v827
        %1373 = vmatmul.mubr.bf16.gmra.mxu0 %v826
        %v1374 = vpop.f32.mrf.mxu0
        %v1375 = vadd.f32 0.0, %v1374
        %v1376 = vpop.f32.mrf.mxu0
        %v1377 = vadd.f32 0.0, %v1376
        %v1378 = vpop.f32.mrf.mxu0
        %v1379 = vpop.f32.mrf.mxu0
        %1380 = vdwg.mxu0
        %1381 = vmatprep.subr.bf16.mxu0 %v1218
        %1382 = vmatpush1.bf16.msra.mxu0 %v1217
        %1383 = vmatprep.subr.bf16.mxu0 %v1213
        %1384 = vmatpush1.bf16.msra.mxu0 %v1212
        %1385 = vmatprep.subr.bf16.mxu0 %v1208
        %1386 = vmatpush1.bf16.msra.mxu0 %v1207
        %1387 = vmatprep.subr.bf16.mxu0 %v1203
        %1388 = vmatpush1.bf16.msra.mxu0 %v1202
        %1389 = vmatprep.subr.bf16.mxu0 %v1198
        %1390 = vmatpush1.bf16.msra.mxu0 %v1197
        %1391 = vmatprep.subr.bf16.mxu0 %v1193
        %1392 = vmatpush1.bf16.msra.mxu0 %v1192
        %1393 = vmatprep.subr.bf16.mxu0 %v1188
        %1394 = vmatpush1.bf16.msra.mxu0 %v1187
        %1395 = vmatprep.subr.bf16.mxu0 %v1183
        %1396 = vmatpush1.bf16.msra.mxu0 %v1182
        %1397 = vmatprep.subr.bf16.mxu0 %v1258
        %1398 = vmatpush2.bf16.msra.mxu0 %v1257
        %1399 = vmatprep.subr.bf16.mxu0 %v1253
        %1400 = vmatpush2.bf16.msra.mxu0 %v1252
        %1401 = vmatprep.subr.bf16.mxu0 %v1248
        %1402 = vmatpush2.bf16.msra.mxu0 %v1247
        %1403 = vmatprep.subr.bf16.mxu0 %v1243
        %1404 = vmatpush2.bf16.msra.mxu0 %v1242
        %1405 = vmatprep.subr.bf16.mxu0 %v1238
        %1406 = vmatpush2.bf16.msra.mxu0 %v1237
        %1407 = vmatprep.subr.bf16.mxu0 %v1233
        %1408 = vmatpush2.bf16.msra.mxu0 %v1232
        %1409 = vmatprep.subr.bf16.mxu0 %v1228
        %1410 = vmatpush2.bf16.msra.mxu0 %v1227
        %1411 = vmatprep.subr.bf16.mxu0 %v1223
        %1412 = vmatpush2.bf16.msra.mxu0 %v1222
        %1413 = vmatprep.mubr.bf16.mxu0 %v827
        %1414 = vmatmul.mubr.bf16.gmra.mxu0 %v826
        %v1415 = vpop.f32.mrf.mxu0
        %v1416 = vadd.f32 0.0, %v1415
        %v1417 = vpop.f32.mrf.mxu0
        %v1418 = vadd.f32 0.0, %v1417
        %v1419 = vpop.f32.mrf.mxu0
        %v1420 = vpop.f32.mrf.mxu0
        %1421 = vdwg.mxu0
        %1422 = vmatprep.subr.bf16.mxu0 0
        %1423 = vmatpush1.bf16.msra.mxu0 %v1219
        %1424 = vmatprep.subr.bf16.mxu0 0
        %1425 = vmatpush1.bf16.msra.mxu0 %v1214
        %1426 = vmatprep.subr.bf16.mxu0 0
        %1427 = vmatpush1.bf16.msra.mxu0 %v1209
        %1428 = vmatprep.subr.bf16.mxu0 0
        %1429 = vmatpush1.bf16.msra.mxu0 %v1204
        %1430 = vmatprep.subr.bf16.mxu0 0
        %1431 = vmatpush1.bf16.msra.mxu0 %v1199
        %1432 = vmatprep.subr.bf16.mxu0 0
        %1433 = vmatpush1.bf16.msra.mxu0 %v1194
        %1434 = vmatprep.subr.bf16.mxu0 0
        %1435 = vmatpush1.bf16.msra.mxu0 %v1189
        %1436 = vmatprep.subr.bf16.mxu0 0
        %1437 = vmatpush1.bf16.msra.mxu0 %v1184
        %1438 = vmatprep.subr.bf16.mxu0 0
        %1439 = vmatpush2.bf16.msra.mxu0 %v1259
        %1440 = vmatprep.subr.bf16.mxu0 0
        %1441 = vmatpush2.bf16.msra.mxu0 %v1254
        %1442 = vmatprep.subr.bf16.mxu0 0
        %1443 = vmatpush2.bf16.msra.mxu0 %v1249
        %1444 = vmatprep.subr.bf16.mxu0 0
        %1445 = vmatpush2.bf16.msra.mxu0 %v1244
        %1446 = vmatprep.subr.bf16.mxu0 0
        %1447 = vmatpush2.bf16.msra.mxu0 %v1239
        %1448 = vmatprep.subr.bf16.mxu0 0
        %1449 = vmatpush2.bf16.msra.mxu0 %v1234
        %1450 = vmatprep.subr.bf16.mxu0 0
        %1451 = vmatpush2.bf16.msra.mxu0 %v1229
        %1452 = vmatprep.subr.bf16.mxu0 0
        %1453 = vmatpush2.bf16.msra.mxu0 %v1224
        %1454 = vmatprep.mubr.bf16.mxu0 %v827
        %1455 = vmatmul.mubr.bf16.gmra.mxu0 %v826
        %v1456 = vpop.f32.mrf.mxu0
        %v1457 = vadd.f32 0.0, %v1456
        %v1458 = vpop.f32.mrf.mxu0
        %v1459 = vpop.f32.mrf.mxu0
        %v1460 = vpop.f32.mrf.mxu0
        %1461 = vdwg.mxu0
        %v1462 = vadd.f32 %v733, %v1375
        %v1463 = vadd.f32 %v735, %v1377
        %v1464 = vadd.f32 %v774, %v1416
        %v1465 = vadd.f32 %v776, %v1418
        %v1466 = vadd.f32 %v815, %v1457
        %1467 = vst [vmem:[%s259] sm:$0xff] %v1462
        %1468 = vst [vmem:[%s259 + $0x8] sm:$0xff] %v1463
        %1469 = vst [vmem:[%s259 + $0x10] sm:$0xff] %v1464
        %1470 = vst [vmem:[%s259 + $0x18] sm:$0xff] %v1465
        %1471 = vst [vmem:[%s259 + $0x20] sm:$0xff] %v1466
        %v1472 = vlaneseq
        %v1473 = vshrl.u32 %v1472, 7
        %s1474 = smul.u32 %s19, 8
        %v1475 = vstv %s1474
        %v1476 = vadd.s32 %v1473, %v1475
        %vm1477 = vcmp.lt.s32.totalorder %v1476, 20
        %v1478 = vsel %vm1477, 1, 0
        %vm1479 = vcmp.eq.s32.totalorder %v1478, 1
        %v1480 = vsel %vm1479, %v1462, 0.0
        %v1481 = vsel %vm1479, %v1463, 0.0
        %v1482 = vsel %vm1479, %v1464, 0.0
        %v1483 = vsel %vm1479, %v1465, 0.0
        %v1484 = vsel %vm1479, %v1466, 0.0
        %1485 = vst [vmem:[%s264] sm:$0xff] 0.0
        %1486 = vst [vmem:[%s264 + $0x8] sm:$0xff] 0.0
        %1487 = vst [vmem:[%s264 + $0x10] sm:$0xff] 0.0
        %1488 = vst [vmem:[%s264 + $0x18] sm:$0xff] 0.0
        %1489 = vst [vmem:[%s264 + $0x20] sm:$0xff] 0.0
        %v1490 = vrot.slane %v1480, 4
        %v1491 = vadd.f32 %v1480, %v1490
        %v1492 = vrot.slane %v1491, 2
        %v1493 = vadd.f32 %v1491, %v1492
        %v1494 = vrot.slane %v1493, 1
        %v1495 = vadd.f32 %v1493, %v1494
        %v1496 = vrot.slane %v1481, 4
        %v1497 = vadd.f32 %v1481, %v1496
        %v1498 = vrot.slane %v1497, 2
        %v1499 = vadd.f32 %v1497, %v1498
        %v1500 = vrot.slane %v1499, 1
        %v1501 = vadd.f32 %v1499, %v1500
        %v1502 = vrot.slane %v1482, 4
        %v1503 = vadd.f32 %v1482, %v1502
        %v1504 = vrot.slane %v1503, 2
        %v1505 = vadd.f32 %v1503, %v1504
        %v1506 = vrot.slane %v1505, 1
        %v1507 = vadd.f32 %v1505, %v1506
        %v1508 = vrot.slane %v1483, 4
        %v1509 = vadd.f32 %v1483, %v1508
        %v1510 = vrot.slane %v1509, 2
        %v1511 = vadd.f32 %v1509, %v1510
        %v1512 = vrot.slane %v1511, 1
        %v1513 = vadd.f32 %v1511, %v1512
        %v1514 = vrot.slane %v1484, 4
        %v1515 = vadd.f32 %v1484, %v1514
        %v1516 = vrot.slane %v1515, 2
        %v1517 = vadd.f32 %v1515, %v1516
        %v1518 = vrot.slane %v1517, 1
        %v1519 = vadd.f32 %v1517, %v1518
        %v1525 = vcombine.low %v1495, %v1501
        %v1526 = vcombine.low %v1507, %v1513
        %v1528 = vunpack.c.l.s4 1966171168
        %v1529 = vunpack.c.0.s8 %v1528
        %v1530 = vlaneseq
        %v1531 = vshrl.u32 %v1530, 7
        %v1532 = vsub.s32 %v1529, %v1531
        %v1533 = vrot.slane %v1525, %v1532
        %v1535 = vunpack.c.l.s4 1966171168
        %v1536 = vunpack.c.0.s8 %v1535
        %v1537 = vlaneseq
        %v1538 = vshrl.u32 %v1537, 7
        %v1539 = vsub.s32 %v1536, %v1538
        %v1540 = vrot.slane %v1526, %v1539
        %v1542 = vunpack.c.l.s4 1966171168
        %v1543 = vunpack.c.0.s8 %v1542
        %v1544 = vlaneseq
        %v1545 = vshrl.u32 %v1544, 7
        %v1546 = vsub.s32 %v1543, %v1545
        %v1547 = vrot.slane %v1519, %v1546
        %v1548 = vcombine.low %v1533, %v1540
        %v1550 = vunpack.c.l.s4 1966171168
        %v1551 = vunpack.c.0.s8 %v1550
        %v1552 = vlaneseq
        %v1553 = vshrl.u32 %v1552, 7
        %v1554 = vsub.s32 %v1551, %v1553
        %v1555 = vrot.slane %v1548, %v1554
        %v1557 = vunpack.c.l.s4 1966171168
        %v1558 = vunpack.c.0.s8 %v1557
        %v1559 = vlaneseq
        %v1560 = vshrl.u32 %v1559, 7
        %v1561 = vsub.s32 %v1558, %v1560
        %v1562 = vrot.slane %v1547, %v1561
        %v1563 = vcombine.low %v1555, %v1562
        %v1565 = vlaneseq
        %vm1566 = vcmp.ge.s32.totalorder %v1565, 0
        %vm1567 = vcmp.lt.s32.totalorder %v1565, 640
        %vm1568 = vmand %vm1566, %vm1567
        %1569 = vst.msk [vmem:[%s264] ss:$8 sm:$0xf] %vm1568, %v1563
        %1570 = vst.msk [vmem:[%s264] ss:$8 sm:$0x10] %vm1568, %v1563
        %v1571 = vmul.f32 %v1480, %v1480
        %v1572 = vmul.f32 %v1481, %v1481
        %v1573 = vmul.f32 %v1482, %v1482
        %v1574 = vmul.f32 %v1483, %v1483
        %v1575 = vmul.f32 %v1484, %v1484
        %v1576 = vrot.slane %v1571, 4
        %v1577 = vadd.f32 %v1571, %v1576
        %v1578 = vrot.slane %v1577, 2
        %v1579 = vadd.f32 %v1577, %v1578
        %v1580 = vrot.slane %v1579, 1
        %v1581 = vadd.f32 %v1579, %v1580
        %v1582 = vrot.slane %v1572, 4
        %v1583 = vadd.f32 %v1572, %v1582
        %v1584 = vrot.slane %v1583, 2
        %v1585 = vadd.f32 %v1583, %v1584
        %v1586 = vrot.slane %v1585, 1
        %v1587 = vadd.f32 %v1585, %v1586
        %v1588 = vrot.slane %v1573, 4
        %v1589 = vadd.f32 %v1573, %v1588
        %v1590 = vrot.slane %v1589, 2
        %v1591 = vadd.f32 %v1589, %v1590
        %v1592 = vrot.slane %v1591, 1
        %v1593 = vadd.f32 %v1591, %v1592
        %v1594 = vrot.slane %v1574, 4
        %v1595 = vadd.f32 %v1574, %v1594
        %v1596 = vrot.slane %v1595, 2
        %v1597 = vadd.f32 %v1595, %v1596
        %v1598 = vrot.slane %v1597, 1
        %v1599 = vadd.f32 %v1597, %v1598
        %v1600 = vrot.slane %v1575, 4
        %v1601 = vadd.f32 %v1575, %v1600
        %v1602 = vrot.slane %v1601, 2
        %v1603 = vadd.f32 %v1601, %v1602
        %v1604 = vrot.slane %v1603, 1
        %v1605 = vadd.f32 %v1603, %v1604
        %v1611 = vcombine.low %v1581, %v1587
        %v1612 = vcombine.low %v1593, %v1599
        %v1614 = vunpack.c.l.s4 1966171168
        %v1615 = vunpack.c.0.s8 %v1614
        %v1616 = vlaneseq
        %v1617 = vshrl.u32 %v1616, 7
        %v1618 = vsub.s32 %v1615, %v1617
        %v1619 = vrot.slane %v1611, %v1618
        %v1621 = vunpack.c.l.s4 1966171168
        %v1622 = vunpack.c.0.s8 %v1621
        %v1623 = vlaneseq
        %v1624 = vshrl.u32 %v1623, 7
        %v1625 = vsub.s32 %v1622, %v1624
        %v1626 = vrot.slane %v1612, %v1625
        %v1628 = vunpack.c.l.s4 1966171168
        %v1629 = vunpack.c.0.s8 %v1628
        %v1630 = vlaneseq
        %v1631 = vshrl.u32 %v1630, 7
        %v1632 = vsub.s32 %v1629, %v1631
        %v1633 = vrot.slane %v1605, %v1632
        %v1634 = vcombine.low %v1619, %v1626
        %v1636 = vunpack.c.l.s4 1966171168
        %v1637 = vunpack.c.0.s8 %v1636
        %v1638 = vlaneseq
        %v1639 = vshrl.u32 %v1638, 7
        %v1640 = vsub.s32 %v1637, %v1639
        %v1641 = vrot.slane %v1634, %v1640
        %v1643 = vunpack.c.l.s4 1966171168
        %v1644 = vunpack.c.0.s8 %v1643
        %v1645 = vlaneseq
        %v1646 = vshrl.u32 %v1645, 7
        %v1647 = vsub.s32 %v1644, %v1646
        %v1648 = vrot.slane %v1633, %v1647
        %v1649 = vcombine.low %v1641, %v1648
        %s1651 = scalar_lea.vmem %s264, 1
        %1652 = vst.msk [vmem:[%s1651] ss:$8 sm:$0xf] %vm1568, %v1649
        %1653 = vst.msk [vmem:[%s1651] ss:$8 sm:$0x10] %vm1568, %v1649
        %p1654 = scmp.lt.s32.totalorder %s19, 3
        %s1655 = scalar_select %p1654, %s19, 3
        %s1656 = smul.addr %s1655, 5
        %s1657 = smul.addr %s1656, 8
        %s1658 = scalar_lea.vmem %s4, %s1657
        %p1659 = scmp.lt.s32.totalorder %s19, 3
        %s1660 = scalar_select %p1659, %s19, 3
        %s1661 = smul.addr %s1660, 5
        %s1662 = smul.addr %s1661, 8
        %s1663 = scalar_lea.vmem %s5, %s1662
        // Predicated region
        $region45: #{_lambda_.2} parent=35 // pred_check
          %p1664 = pneg %p126
        $region46: #{_lambda_.2} parent=35 // pred_check_branch
          %1666 = sbr.rel (%p1664) target = $region48
        $region47: #{_lambda_.2} parent=35 // pred_region
          _
        $region48: #{_lambda_.2} parent=35 // pred_fallthru
          _
        // Predicated region
        $region49: #{_lambda_.2} parent=35 // pred_check
          %p1667 = pneg %p152
        $region50: #{_lambda_.2} parent=35 // pred_check_branch
          %1669 = sbr.rel (%p1667) target = $region52
        $region51: #{_lambda_.2} parent=35 // pred_region
          _
        $region52: #{_lambda_.2} parent=35 // pred_fallthru
          _
      $region36: #{_lambda_.2} parent=5 // pred_fallthru
        _
      %p1670 = scmp.le.s32.totalorder 2, %s14
      // Predicated region
      $region53: #{_lambda_.2} parent=5 // pred_check
        %p1671 = pneg %p1670
      $region54: #{_lambda_.2} parent=5 // pred_check_branch
        %1673 = sbr.rel (%p1671) target = $region56
      $region55: #{_lambda_.2} parent=5 // pred_region
        %s1674 = ssub.s32 %s14, 2
        // Predicated region
        $region57: #{_lambda_.2} parent=55 // pred_check
          %p1675 = pneg %p132
        $region58: #{_lambda_.2} parent=55 // pred_check_branch
          %1677 = sbr.rel (%p1675) target = $region60
        $region59: #{_lambda_.2} parent=55 // pred_region
          %p1678 = scmp.lt.s32.totalorder %s20, 3
          %s1679 = scalar_select %p1678, %s20, 3
          %s1680 = smul.addr %s1679, 5
          %s1681 = smul.addr %s1680, 8
          %s1682 = scalar_lea.vmem %s4, %s1681
        $region60: #{_lambda_.2} parent=55 // pred_fallthru
          _
        // Predicated region
        $region61: #{_lambda_.2} parent=55 // pred_check
          %p1683 = pneg %p158
        $region62: #{_lambda_.2} parent=55 // pred_check_branch
          %1685 = sbr.rel (%p1683) target = $region64
        $region63: #{_lambda_.2} parent=55 // pred_region
          %p1686 = scmp.lt.s32.totalorder %s20, 3
          %s1687 = scalar_select %p1686, %s20, 3
          %s1688 = smul.addr %s1687, 5
          %s1689 = smul.addr %s1688, 8
          %s1690 = scalar_lea.vmem %s5, %s1689
        $region64: #{_lambda_.2} parent=55 // pred_fallthru
          _
      $region56: #{_lambda_.2} parent=5 // pred_fallthru
        _
    $region6: #{_lambda_.2} parent=1 // loop_footer
      %s18 = sadd.s32 1, %s14
    $region7: #{_lambda_.2} parent=1 // loop_footer_branch
      %13 = sbr.rel target = $region3
    $region8: #{_lambda_.2} parent=1 // loop_exit
      _
    %1691 = vsyncpa [#allocation3], 1
    %s1692 = scalar_lea.sflag [#allocation3], 1
    %1693 = vsyncpa %s1692, 1
    %1694 = vsyncpa [#allocation5], 1

</llo_original>
